<compile_context>
chip_gen: v5e
topology: v5e:2x2
jax: 0.10.0
libtpu: 0.0.40
codegen_flags: <defaults>
</compile_context>

<pallas_src>
import functools

import jax
import jax.numpy as jnp
from jax.experimental import pallas as pl
from jax.experimental.pallas import tpu as pltpu

K_IN = 28 * 28          # 784
H1, H2 = 128, 64
N_OUT = 10
N_PAD = 128             # fc3 output padded to one full lane vreg (lane-dense store)


def _mlp_kernel(x_ref, w1_ref, b1_ref, w2_ref, b2_ref, w3_ref, b3_ref, o_ref):
    # fc1 + ReLU. Cast x to the weight dtype (bf16) in-VMEM; MXU accumulates f32.
    x = x_ref[...].astype(w1_ref.dtype)
    h1 = jnp.dot(x, w1_ref[...], preferred_element_type=jnp.float32)
    h1 = jnp.maximum(h1 + b1_ref[...], 0.0)
    # fc2 + ReLU
    h2 = jnp.dot(h1.astype(w2_ref.dtype), w2_ref[...],
                 preferred_element_type=jnp.float32)
    h2 = jnp.maximum(h2 + b2_ref[...], 0.0)
    # fc3 (logits; columns 10..127 are exact zeros from zero-padded weight/bias)
    h3 = jnp.dot(h2.astype(w3_ref.dtype), w3_ref[...],
                 preferred_element_type=jnp.float32)
    o_ref[...] = (h3 + b3_ref[...]).astype(o_ref.dtype)


def prepare_params(params, compute_dtype=jnp.bfloat16):
    """One-time parameter prep (cast + N-pad). Keep this OUT of the per-call path.

    params: dict of w1,b1,w2,b2,w3,b3 stored as [in, out] / [1, out].
    """
    w1 = params["w1"].astype(compute_dtype)                                   # (784,128)
    w2 = params["w2"].astype(compute_dtype)                                   # (128, 64)
    w3 = jnp.pad(params["w3"], ((0, 0), (0, N_PAD - N_OUT))).astype(compute_dtype)  # (64,128)
    b1 = params["b1"].astype(jnp.float32)                                     # (1, 128)
    b2 = params["b2"].astype(jnp.float32)                                     # (1, 64)
    b3 = jnp.pad(params["b3"], ((0, 0), (0, N_PAD - N_OUT))).astype(jnp.float32)    # (1, 128)
    return (w1, b1, w2, b2, w3, b3)


@functools.partial(jax.jit, static_argnames=("tb", "out_dtype"))
def feed_forward_nn(x, prepared, *, tb=512, out_dtype=jnp.bfloat16):
    """x: [B, 784] (f32 or bf16). prepared: output of prepare_params.

    Returns [B, 10] float32 logits.
    tb: batch tile. 512 is a good default everywhere; cap ~1024 on v5e (16 MiB
        scoped VMEM) or add vmem_limit_bytes if you go larger. On v7x keep
        cdiv(B, tb) >= ~16 at large batch so both TensorCores stay pipelined.
    """
    w1, b1, w2, b2, w3, b3 = prepared
    B = x.shape[0]
    assert x.shape[1] == K_IN, x.shape

    # Batch tiling without any batch padding:
    #  - B <= tb: one block of exactly B rows (full-dim block is always legal).
    #  - else: grid over cdiv(B, tb); Pallas masks the ragged last tile
    #    (out-of-range output rows are dropped, garbage input rows only feed
    #    rows that are dropped).
    if B <= tb:
        tb_eff, n_tiles = B, 1
    else:
        tb_eff, n_tiles = tb, pl.cdiv(B, tb)

    resident = lambda shape: pl.BlockSpec(shape, lambda i: (0,) * len(shape))

    out_padded = pl.pallas_call(
        _mlp_kernel,
        out_shape=jax.ShapeDtypeStruct((B, N_PAD), out_dtype),
        grid=(n_tiles,),
        in_specs=[
            pl.BlockSpec((tb_eff, K_IN), lambda i: (i, 0)),   # x tile (auto-pipelined)
            resident((K_IN, H1)), resident((1, H1)),          # fc1 (VMEM-resident)
            resident((H1, H2)),   resident((1, H2)),          # fc2
            resident((H2, N_PAD)), resident((1, N_PAD)),      # fc3
        ],
        out_specs=pl.BlockSpec((tb_eff, N_PAD), lambda i: (i, 0)),
        compiler_params=pltpu.CompilerParams(
            dimension_semantics=("parallel",),                # megacore on v7x
        ),
    )(x, w1, b1, w2, b2, w3, b3)

    return out_padded[:, :N_OUT].astype(jnp.float32)


def init_params(key):
    """Deterministic synthetic init matching nn.Linear shapes (stored as [in, out])."""
    ks = jax.random.split(key, 6)

    def linear(kw, kb, fan_in, fan_out):
        bound = 1.0 / jnp.sqrt(fan_in)
        w = jax.random.uniform(kw, (fan_in, fan_out), jnp.float32, -bound, bound)
        b = jax.random.uniform(kb, (1, fan_out), jnp.float32, -bound, bound)
        return w, b

    w1, b1 = linear(ks[0], ks[1], K_IN, H1)
    w2, b2 = linear(ks[2], ks[3], H1, H2)
    w3, b3 = linear(ks[4], ks[5], H2, N_OUT)
    return {"w1": w1, "b1": b1, "w2": w2, "b2": b2, "w3": w3, "b3": b3}


def _reference(x, p):
    h1 = jnp.maximum(x @ p["w1"] + p["b1"], 0.0)
    h2 = jnp.maximum(h1 @ p["w2"] + p["b2"], 0.0)
    return h2 @ p["w3"] + p["b3"]


if __name__ == "__main__":
    key = jax.random.PRNGKey(0)
    k_x, k_p = jax.random.split(key)

    B = 200
    x = jax.random.normal(k_x, (B, K_IN), jnp.float32)
    params = init_params(k_p)
    prepared = prepare_params(params)          # one-time weight cast/pad

    # Path 1: whole batch in a single block (B <= tb) — no grid overhead.
    out = jax.block_until_ready(feed_forward_nn(x, prepared, tb=512))

    # Path 2: multi-tile grid with a ragged last tile (exercises masking).
    out_tiled = jax.block_until_ready(feed_forward_nn(x, prepared, tb=64))

    ref = _reference(x, params)
    assert out.shape == (B, N_OUT), out.shape
    # bf16 activations/weights with f32 MXU accumulation and bf16 logit store:
    # loosen tolerance vs the f32 reference.
    err1 = float(jnp.max(jnp.abs(out - ref)))
    err2 = float(jnp.max(jnp.abs(out_tiled - ref)))
    assert jnp.allclose(out, ref, atol=3e-2, rtol=3e-2), f"single-block max err {err1}"
    assert jnp.allclose(out_tiled, ref, atol=3e-2, rtol=3e-2), f"tiled max err {err2}"

    print("KERNEL_OK")
</pallas_src>

<mosaic_0001>
module attributes {stable_mosaic.version = 11 : i64} {
  func.func @_mlp_kernel(%arg0: i32, %arg1: memref<200x784xf32, #tpu.memory_space<vmem>>, %arg2: memref<784x128xbf16, #tpu.memory_space<vmem>>, %arg3: memref<1x128xf32, #tpu.memory_space<vmem>>, %arg4: memref<128x64xbf16, #tpu.memory_space<vmem>>, %arg5: memref<1x64xf32, #tpu.memory_space<vmem>>, %arg6: memref<64x128xbf16, #tpu.memory_space<vmem>>, %arg7: memref<1x128xf32, #tpu.memory_space<vmem>>, %arg8: memref<200x128xbf16, #tpu.memory_space<vmem>>) attributes {dimension_semantics = [#tpu.dimension_semantics<parallel>], iteration_bounds = array<i64: 1>, scalar_prefetch = 0 : i64, scratch_operands = 0 : i64, tpu.core_type = #tpu.core_type<tc>, window_params = [{transform_indices = @transform_0, window_bounds = array<i64: 200, 784>}, {pipeline_mode = #tpu.pipeline_mode<synchronous>, transform_indices = @transform_1, window_bounds = array<i64: 784, 128>}, {pipeline_mode = #tpu.pipeline_mode<synchronous>, transform_indices = @transform_2, window_bounds = array<i64: 1, 128>}, {pipeline_mode = #tpu.pipeline_mode<synchronous>, transform_indices = @transform_3, window_bounds = array<i64: 128, 64>}, {pipeline_mode = #tpu.pipeline_mode<synchronous>, transform_indices = @transform_4, window_bounds = array<i64: 1, 64>}, {pipeline_mode = #tpu.pipeline_mode<synchronous>, transform_indices = @transform_5, window_bounds = array<i64: 64, 128>}, {pipeline_mode = #tpu.pipeline_mode<synchronous>, transform_indices = @transform_6, window_bounds = array<i64: 1, 128>}, {transform_indices = @transform_7, window_bounds = array<i64: 200, 128>}]} {
    %c0 = arith.constant 0 : index
    %c0_0 = arith.constant 0 : index
    %0 = vector.load %arg1[%c0, %c0_0] : memref<200x784xf32, #tpu.memory_space<vmem>>, vector<200x784xf32>
    %1 = arith.truncf %0 : vector<200x784xf32> to vector<200x784xbf16>
    %c0_1 = arith.constant 0 : index
    %c0_2 = arith.constant 0 : index
    %2 = vector.load %arg2[%c0_1, %c0_2] : memref<784x128xbf16, #tpu.memory_space<vmem>>, vector<784x128xbf16>
    %cst = arith.constant dense<0.000000e+00> : vector<200x128xf32>
    %3 = tpu.matmul %1, %2, %cst {dimension_numbers = #tpu.dot_dimension_numbers<[1], [0], [0], [1], [0, 0, 1, 1], [], []>} : vector<200x784xbf16>, vector<784x128xbf16>, vector<200x128xf32> -> vector<200x128xf32>
    %c0_3 = arith.constant 0 : index
    %c0_4 = arith.constant 0 : index
    %4 = vector.load %arg3[%c0_3, %c0_4] : memref<1x128xf32, #tpu.memory_space<vmem>>, vector<1x128xf32>
    %5 = vector.broadcast %4 : vector<1x128xf32> to vector<200x128xf32>
    %6 = arith.addf %3, %5 : vector<200x128xf32>
    %cst_5 = arith.constant 0.000000e+00 : f32
    %7 = vector.broadcast %cst_5 : f32 to vector<200x128xf32>
    %8 = arith.maximumf %6, %7 : vector<200x128xf32>
    %9 = arith.truncf %8 : vector<200x128xf32> to vector<200x128xbf16>
    %c0_6 = arith.constant 0 : index
    %c0_7 = arith.constant 0 : index
    %10 = vector.load %arg4[%c0_6, %c0_7] : memref<128x64xbf16, #tpu.memory_space<vmem>>, vector<128x64xbf16>
    %cst_8 = arith.constant dense<0.000000e+00> : vector<200x64xf32>
    %11 = tpu.matmul %9, %10, %cst_8 {dimension_numbers = #tpu.dot_dimension_numbers<[1], [0], [0], [1], [0, 0, 1, 1], [], []>} : vector<200x128xbf16>, vector<128x64xbf16>, vector<200x64xf32> -> vector<200x64xf32>
    %c0_9 = arith.constant 0 : index
    %c0_10 = arith.constant 0 : index
    %12 = vector.load %arg5[%c0_9, %c0_10] : memref<1x64xf32, #tpu.memory_space<vmem>>, vector<1x64xf32>
    %13 = vector.broadcast %12 : vector<1x64xf32> to vector<200x64xf32>
    %14 = arith.addf %11, %13 : vector<200x64xf32>
    %cst_11 = arith.constant 0.000000e+00 : f32
    %15 = vector.broadcast %cst_11 : f32 to vector<200x64xf32>
    %16 = arith.maximumf %14, %15 : vector<200x64xf32>
    %17 = arith.truncf %16 : vector<200x64xf32> to vector<200x64xbf16>
    %c0_12 = arith.constant 0 : index
    %c0_13 = arith.constant 0 : index
    %18 = vector.load %arg6[%c0_12, %c0_13] : memref<64x128xbf16, #tpu.memory_space<vmem>>, vector<64x128xbf16>
    %cst_14 = arith.constant dense<0.000000e+00> : vector<200x128xf32>
    %19 = tpu.matmul %17, %18, %cst_14 {dimension_numbers = #tpu.dot_dimension_numbers<[1], [0], [0], [1], [0, 0, 1, 1], [], []>} : vector<200x64xbf16>, vector<64x128xbf16>, vector<200x128xf32> -> vector<200x128xf32>
    %c0_15 = arith.constant 0 : index
    %c0_16 = arith.constant 0 : index
    %20 = vector.load %arg7[%c0_15, %c0_16] : memref<1x128xf32, #tpu.memory_space<vmem>>, vector<1x128xf32>
    %21 = vector.broadcast %20 : vector<1x128xf32> to vector<200x128xf32>
    %22 = arith.addf %19, %21 : vector<200x128xf32>
    %23 = arith.truncf %22 : vector<200x128xf32> to vector<200x128xbf16>
    %c0_17 = arith.constant 0 : index
    %c0_18 = arith.constant 0 : index
    %24 = vector.load %arg8[%c0_17, %c0_18] : memref<200x128xbf16, #tpu.memory_space<vmem>>, vector<200x128xbf16>
    tpu.vector_store %arg8[%c0_17, %c0_18], %23 {strides = array<i32>} : memref<200x128xbf16, #tpu.memory_space<vmem>>, vector<200x128xbf16>,
    return
  }
  func.func @transform_0(%arg0: i32) -> (i32, i32) {
    %c0_i32 = arith.constant 0 : i32
    %c0_i32_0 = arith.constant 0 : i32
    return %arg0, %c0_i32 : i32, i32
  }
  func.func @transform_1(%arg0: i32) -> (i32, i32) {
    %c0_i32 = arith.constant 0 : i32
    %c0_i32_0 = arith.constant 0 : i32
    %c0_i32_1 = arith.constant 0 : i32
    return %c0_i32, %c0_i32_0 : i32, i32
  }
  func.func @transform_2(%arg0: i32) -> (i32, i32) {
    %c0_i32 = arith.constant 0 : i32
    %c0_i32_0 = arith.constant 0 : i32
    %c0_i32_1 = arith.constant 0 : i32
    return %c0_i32, %c0_i32_0 : i32, i32
  }
  func.func @transform_3(%arg0: i32) -> (i32, i32) {
    %c0_i32 = arith.constant 0 : i32
    %c0_i32_0 = arith.constant 0 : i32
    %c0_i32_1 = arith.constant 0 : i32
    return %c0_i32, %c0_i32_0 : i32, i32
  }
  func.func @transform_4(%arg0: i32) -> (i32, i32) {
    %c0_i32 = arith.constant 0 : i32
    %c0_i32_0 = arith.constant 0 : i32
    %c0_i32_1 = arith.constant 0 : i32
    return %c0_i32, %c0_i32_0 : i32, i32
  }
  func.func @transform_5(%arg0: i32) -> (i32, i32) {
    %c0_i32 = arith.constant 0 : i32
    %c0_i32_0 = arith.constant 0 : i32
    %c0_i32_1 = arith.constant 0 : i32
    return %c0_i32, %c0_i32_0 : i32, i32
  }
  func.func @transform_6(%arg0: i32) -> (i32, i32) {
    %c0_i32 = arith.constant 0 : i32
    %c0_i32_0 = arith.constant 0 : i32
    %c0_i32_1 = arith.constant 0 : i32
    return %c0_i32, %c0_i32_0 : i32, i32
  }
  func.func @transform_7(%arg0: i32) -> (i32, i32) {
    %c0_i32 = arith.constant 0 : i32
    %c0_i32_0 = arith.constant 0 : i32
    return %arg0, %c0_i32 : i32, i32
  }
}

</mosaic_0001>

<llo_original>
// kernel: feed_forward_nn.1
$region0: #{feed_forward_nn.1}
  #allocation0 [shape = 'u32[]', space=smem, size = 0x4, offset = 0x4, fixed_abs, tag = 'smem constant byte address 0x4 - core index']
  #allocation1 [shape = 'u32[72,128]{1,0:T(1,128)}', space=vmem, size = 0x9000, scoped, tag = 'internal scratch']
  %s0 = inlined_call_operand.hbm [shape: f32[200,784], index: 0, kind: input, shape index: {}]
  %s1 = inlined_call_operand.hbm [shape: bf16[784,128], index: 1, kind: input, shape index: {}]
  %s2 = inlined_call_operand.vmem [shape: f32[1,128], index: 2, kind: input, shape index: {}]
  %s3 = inlined_call_operand.vmem [shape: bf16[128,64], index: 3, kind: input, shape index: {}]
  %s4 = inlined_call_operand.vmem [shape: f32[1,64], index: 4, kind: input, shape index: {}]
  %s5 = inlined_call_operand.vmem [shape: bf16[64,128], index: 5, kind: input, shape index: {}]
  %s6 = inlined_call_operand.vmem [shape: f32[1,128], index: 6, kind: input, shape index: {}]
  %s7 = inlined_call_operand.vmem [shape: bf16[200,128], index: 7, kind: output, shape index: {}]
  %s8 = sld [smem:[#allocation0]]
  $region46: #{feed_forward_nn.1} parent=0
    _
  %s10 = ssub.s32 1, %s8
  %s11 = scalar_select 0, %s10, %s8
  $region1: #{feed_forward_nn.1} parent=0
    #allocation2 [shape = 'u8[716800]{0}', space=vmem, size = 0xaf000, scoped, tag = 'input window, operand 0, single buffered']
    #allocation3 [shape = 's32[1]{0}', space=sflag, size = 0x4, scoped, tag = 'scoped memory for feed_forward_nn.1']
    #allocation4 [shape = 'u8[200704]{0}', space=vmem, size = 0x31000, scoped, tag = 'input window, operand 1, single buffered']
    #allocation5 [shape = 's32[1]{0}', space=sflag, size = 0x4, scoped, tag = 'scoped memory for feed_forward_nn.1']
    %12 = vsyncpa [#allocation3], 0
    %13 = vsyncpa [#allocation5], 0
    // Predicated region
    $region2: #{feed_forward_nn.1} parent=1 // pred_check
      _
    $region3: #{feed_forward_nn.1} parent=1 // pred_check_branch
      %15 = sbr.rel (0) target = $region5
    $region4: #{feed_forward_nn.1} parent=1 // pred_region
      %17 = vsyncadd [#allocation3], 0
      %s18 = sshll.u32 %s0, 4
      %s19 = int_to_ptr.hbm [resolvable:$true] %s18
      %s20 = sshll.u32 [#allocation2], 4
      %s21 = int_to_ptr.vmem [resolvable:$true] %s20
      %26 = dma.hbm_to_vmem [thread:$0]  %s19, 22400, %s21, [#allocation3], 896, 896, 56
    $region5: #{feed_forward_nn.1} parent=1 // pred_fallthru
      _
    // Predicated region
    $region6: #{feed_forward_nn.1} parent=1 // pred_check
      _
    $region7: #{feed_forward_nn.1} parent=1 // pred_check_branch
      %28 = sbr.rel (0) target = $region9
    $region8: #{feed_forward_nn.1} parent=1 // pred_region
      %30 = vsyncadd [#allocation5], 0
      %s31 = sshll.u32 %s1, 4
      %s32 = int_to_ptr.hbm [resolvable:$true] %s31
      %s33 = sshll.u32 [#allocation4], 4
      %s34 = int_to_ptr.vmem [resolvable:$true] %s33
      %39 = dma.hbm_to_vmem [thread:$0]  %s32, 6272, %s34, [#allocation5], 64, 64, 4
    $region9: #{feed_forward_nn.1} parent=1 // pred_fallthru
      _
    // Predicated region
    $region10: #{feed_forward_nn.1} parent=1 // pred_check
      _
    $region11: #{feed_forward_nn.1} parent=1 // pred_check_branch
      %41 = sbr.rel (0) target = $region13
    $region12: #{feed_forward_nn.1} parent=1 // pred_region
      _
    $region13: #{feed_forward_nn.1} parent=1 // pred_fallthru
      _
    // Predicated region
    $region14: #{feed_forward_nn.1} parent=1 // pred_check
      _
    $region15: #{feed_forward_nn.1} parent=1 // pred_check_branch
      %43 = sbr.rel (0) target = $region17
    $region16: #{feed_forward_nn.1} parent=1 // pred_region
      _
    $region17: #{feed_forward_nn.1} parent=1 // pred_fallthru
      _
    // Predicated region
    $region18: #{feed_forward_nn.1} parent=1 // pred_check
      _
    $region19: #{feed_forward_nn.1} parent=1 // pred_check_branch
      %45 = sbr.rel (0) target = $region21
    $region20: #{feed_forward_nn.1} parent=1 // pred_region
      _
    $region21: #{feed_forward_nn.1} parent=1 // pred_fallthru
      _
    // Predicated region
    $region22: #{feed_forward_nn.1} parent=1 // pred_check
      _
    $region23: #{feed_forward_nn.1} parent=1 // pred_check_branch
      %47 = sbr.rel (0) target = $region25
    $region24: #{feed_forward_nn.1} parent=1 // pred_region
      _
    $region25: #{feed_forward_nn.1} parent=1 // pred_fallthru
      _
    // Predicated region
    $region26: #{feed_forward_nn.1} parent=1 // pred_check
      _
    $region27: #{feed_forward_nn.1} parent=1 // pred_check_branch
      %49 = sbr.rel (0) target = $region29
    $region28: #{feed_forward_nn.1} parent=1 // pred_region
      _
    $region29: #{feed_forward_nn.1} parent=1 // pred_fallthru
      _
    // Predicated region
    $region30: #{feed_forward_nn.1} parent=1 // pred_check
      _
    $region31: #{feed_forward_nn.1} parent=1 // pred_check_branch
      %51 = sbr.rel (0) target = $region33
    $region32: #{feed_forward_nn.1} parent=1 // pred_region
      %53 = dma.done [#allocation3], 22400
    $region33: #{feed_forward_nn.1} parent=1 // pred_fallthru
      _
    // Predicated region
    $region34: #{feed_forward_nn.1} parent=1 // pred_check
      _
    $region35: #{feed_forward_nn.1} parent=1 // pred_check_branch
      %55 = sbr.rel (0) target = $region37
    $region36: #{feed_forward_nn.1} parent=1 // pred_region
      %57 = dma.done [#allocation5], 6272
    $region37: #{feed_forward_nn.1} parent=1 // pred_fallthru
      _
    %v59 = vld [vmem:[#allocation2] sm:$0xff]
    %v60 = vld [vmem:[#allocation2 + $0x8] sm:$0xff]
    %v61 = vld [vmem:[#allocation2 + $0x10] sm:$0xff]
    %v62 = vld [vmem:[#allocation2 + $0x18] sm:$0xff]
    %v63 = vld [vmem:[#allocation2 + $0x20] sm:$0xff]
    %v64 = vld [vmem:[#allocation2 + $0x28] sm:$0xff]
    %v65 = vld [vmem:[#allocation2 + $0x30] sm:$0xff]
    %v66 = vld [vmem:[#allocation2 + $0x38] sm:$0xff]
    %v67 = vld [vmem:[#allocation2 + $0x40] sm:$0xff]
    %v68 = vld [vmem:[#allocation2 + $0x48] sm:$0xff]
    %v69 = vld [vmem:[#allocation2 + $0x50] sm:$0xff]
    %v70 = vld [vmem:[#allocation2 + $0x58] sm:$0xff]
    %v71 = vld [vmem:[#allocation2 + $0x60] sm:$0xff]
    %v72 = vld [vmem:[#allocation2 + $0x68] sm:$0xff]
    %v73 = vld [vmem:[#allocation2 + $0x70] sm:$0xff]
    %v74 = vld [vmem:[#allocation2 + $0x78] sm:$0xff]
    %v75 = vld [vmem:[#allocation2 + $0x80] sm:$0xff]
    %v76 = vld [vmem:[#allocation2 + $0x88] sm:$0xff]
    %v77 = vld [vmem:[#allocation2 + $0x90] sm:$0xff]
    %v78 = vld [vmem:[#allocation2 + $0x98] sm:$0xff]
    %v79 = vld [vmem:[#allocation2 + $0xa0] sm:$0xff]
    %v80 = vld [vmem:[#allocation2 + $0xa8] sm:$0xff]
    %v81 = vld [vmem:[#allocation2 + $0xb0] sm:$0xff]
    %v82 = vld [vmem:[#allocation2 + $0xb8] sm:$0xff]
    %v83 = vld [vmem:[#allocation2 + $0xc0] sm:$0xff]
    %v84 = vld [vmem:[#allocation2 + $0xc8] sm:$0xff]
    %v85 = vld [vmem:[#allocation2 + $0xd0] sm:$0xff]
    %v86 = vld [vmem:[#allocation2 + $0xd8] sm:$0xff]
    %v87 = vld [vmem:[#allocation2 + $0xe0] sm:$0xff]
    %v88 = vld [vmem:[#allocation2 + $0xe8] sm:$0xff]
    %v89 = vld [vmem:[#allocation2 + $0xf0] sm:$0xff]
    %v90 = vld [vmem:[#allocation2 + $0xf8] sm:$0xff]
    %v91 = vld [vmem:[#allocation2 + $0x100] sm:$0xff]
    %v92 = vld [vmem:[#allocation2 + $0x108] sm:$0xff]
    %v93 = vld [vmem:[#allocation2 + $0x110] sm:$0xff]
    %v94 = vld [vmem:[#allocation2 + $0x118] sm:$0xff]
    %v95 = vld [vmem:[#allocation2 + $0x120] sm:$0xff]
    %v96 = vld [vmem:[#allocation2 + $0x128] sm:$0xff]
    %v97 = vld [vmem:[#allocation2 + $0x130] sm:$0xff]
    %v98 = vld [vmem:[#allocation2 + $0x138] sm:$0xff]
    %v99 = vld [vmem:[#allocation2 + $0x140] sm:$0xff]
    %v100 = vld [vmem:[#allocation2 + $0x148] sm:$0xff]
    %v101 = vld [vmem:[#allocation2 + $0x150] sm:$0xff]
    %v102 = vld [vmem:[#allocation2 + $0x158] sm:$0xff]
    %v103 = vld [vmem:[#allocation2 + $0x160] sm:$0xff]
    %v104 = vld [vmem:[#allocation2 + $0x168] sm:$0xff]
    %v105 = vld [vmem:[#allocation2 + $0x170] sm:$0xff]
    %v106 = vld [vmem:[#allocation2 + $0x178] sm:$0xff]
    %v107 = vld [vmem:[#allocation2 + $0x180] sm:$0xff]
    %v108 = vld [vmem:[#allocation2 + $0x188] sm:$0xff]
    %v109 = vld [vmem:[#allocation2 + $0x190] sm:$0xff]
    %v110 = vld [vmem:[#allocation2 + $0x198] sm:$0xff]
    %v111 = vld [vmem:[#allocation2 + $0x1a0] sm:$0xff]
    %v112 = vld [vmem:[#allocation2 + $0x1a8] sm:$0xff]
    %v113 = vld [vmem:[#allocation2 + $0x1b0] sm:$0xff]
    %v114 = vld [vmem:[#allocation2 + $0x1b8] sm:$0xff]
    %v115 = vld [vmem:[#allocation2 + $0x1c0] sm:$0xff]
    %v116 = vld [vmem:[#allocation2 + $0x1c8] sm:$0xff]
    %v117 = vld [vmem:[#allocation2 + $0x1d0] sm:$0xff]
    %v118 = vld [vmem:[#allocation2 + $0x1d8] sm:$0xff]
    %v119 = vld [vmem:[#allocation2 + $0x1e0] sm:$0xff]
    %v120 = vld [vmem:[#allocation2 + $0x1e8] sm:$0xff]
    %v121 = vld [vmem:[#allocation2 + $0x1f0] sm:$0xff]
    %v122 = vld [vmem:[#allocation2 + $0x1f8] sm:$0xff]
    %v123 = vld [vmem:[#allocation2 + $0x200] sm:$0xff]
    %v124 = vld [vmem:[#allocation2 + $0x208] sm:$0xff]
    %v125 = vld [vmem:[#allocation2 + $0x210] sm:$0xff]
    %v126 = vld [vmem:[#allocation2 + $0x218] sm:$0xff]
    %v127 = vld [vmem:[#allocation2 + $0x220] sm:$0xff]
    %v128 = vld [vmem:[#allocation2 + $0x228] sm:$0xff]
    %v129 = vld [vmem:[#allocation2 + $0x230] sm:$0xff]
    %v130 = vld [vmem:[#allocation2 + $0x238] sm:$0xff]
    %v131 = vld [vmem:[#allocation2 + $0x240] sm:$0xff]
    %v132 = vld [vmem:[#allocation2 + $0x248] sm:$0xff]
    %v133 = vld [vmem:[#allocation2 + $0x250] sm:$0xff]
    %v134 = vld [vmem:[#allocation2 + $0x258] sm:$0xff]
    %v135 = vld [vmem:[#allocation2 + $0x260] sm:$0xff]
    %v136 = vld [vmem:[#allocation2 + $0x268] sm:$0xff]
    %v137 = vld [vmem:[#allocation2 + $0x270] sm:$0xff]
    %v138 = vld [vmem:[#allocation2 + $0x278] sm:$0xff]
    %v139 = vld [vmem:[#allocation2 + $0x280] sm:$0xff]
    %v140 = vld [vmem:[#allocation2 + $0x288] sm:$0xff]
    %v141 = vld [vmem:[#allocation2 + $0x290] sm:$0xff]
    %v142 = vld [vmem:[#allocation2 + $0x298] sm:$0xff]
    %v143 = vld [vmem:[#allocation2 + $0x2a0] sm:$0xff]
    %v144 = vld [vmem:[#allocation2 + $0x2a8] sm:$0xff]
    %v145 = vld [vmem:[#allocation2 + $0x2b0] sm:$0xff]
    %v146 = vld [vmem:[#allocation2 + $0x2b8] sm:$0xff]
    %v147 = vld [vmem:[#allocation2 + $0x2c0] sm:$0xff]
    %v148 = vld [vmem:[#allocation2 + $0x2c8] sm:$0xff]
    %v149 = vld [vmem:[#allocation2 + $0x2d0] sm:$0xff]
    %v150 = vld [vmem:[#allocation2 + $0x2d8] sm:$0xff]
    %v151 = vld [vmem:[#allocation2 + $0x2e0] sm:$0xff]
    %v152 = vld [vmem:[#allocation2 + $0x2e8] sm:$0xff]
    %v153 = vld [vmem:[#allocation2 + $0x2f0] sm:$0xff]
    %v154 = vld [vmem:[#allocation2 + $0x2f8] sm:$0xff]
    %v155 = vld [vmem:[#allocation2 + $0x300] sm:$0xff]
    %v156 = vld [vmem:[#allocation2 + $0x308] sm:$0xff]
    %v157 = vld [vmem:[#allocation2 + $0x310] sm:$0xff]
    %v158 = vld [vmem:[#allocation2 + $0x318] sm:$0xff]
    %v159 = vld [vmem:[#allocation2 + $0x320] sm:$0xff]
    %v160 = vld [vmem:[#allocation2 + $0x328] sm:$0xff]
    %v161 = vld [vmem:[#allocation2 + $0x330] sm:$0xff]
    %v162 = vld [vmem:[#allocation2 + $0x338] sm:$0xff]
    %v163 = vld [vmem:[#allocation2 + $0x340] sm:$0xff]
    %v164 = vld [vmem:[#allocation2 + $0x348] sm:$0xff]
    %v165 = vld [vmem:[#allocation2 + $0x350] sm:$0xff]
    %v166 = vld [vmem:[#allocation2 + $0x358] sm:$0xff]
    %v167 = vld [vmem:[#allocation2 + $0x360] sm:$0xff]
    %v168 = vld [vmem:[#allocation2 + $0x368] sm:$0xff]
    %v169 = vld [vmem:[#allocation2 + $0x370] sm:$0xff]
    %v170 = vld [vmem:[#allocation2 + $0x378] sm:$0xff]
    %v171 = vld [vmem:[#allocation2 + $0x380] sm:$0xff]
    %v172 = vld [vmem:[#allocation2 + $0x388] sm:$0xff]
    %v173 = vld [vmem:[#allocation2 + $0x390] sm:$0xff]
    %v174 = vld [vmem:[#allocation2 + $0x398] sm:$0xff]
    %v175 = vld [vmem:[#allocation2 + $0x3a0] sm:$0xff]
    %v176 = vld [vmem:[#allocation2 + $0x3a8] sm:$0xff]
    %v177 = vld [vmem:[#allocation2 + $0x3b0] sm:$0xff]
    %v178 = vld [vmem:[#allocation2 + $0x3b8] sm:$0xff]
    %v179 = vld [vmem:[#allocation2 + $0x3c0] sm:$0xff]
    %v180 = vld [vmem:[#allocation2 + $0x3c8] sm:$0xff]
    %v181 = vld [vmem:[#allocation2 + $0x3d0] sm:$0xff]
    %v182 = vld [vmem:[#allocation2 + $0x3d8] sm:$0xff]
    %v183 = vld [vmem:[#allocation2 + $0x3e0] sm:$0xff]
    %v184 = vld [vmem:[#allocation2 + $0x3e8] sm:$0xff]
    %v185 = vld [vmem:[#allocation2 + $0x3f0] sm:$0xff]
    %v186 = vld [vmem:[#allocation2 + $0x3f8] sm:$0xff]
    %v187 = vld [vmem:[#allocation2 + $0x400] sm:$0xff]
    %v188 = vld [vmem:[#allocation2 + $0x408] sm:$0xff]
    %v189 = vld [vmem:[#allocation2 + $0x410] sm:$0xff]
    %v190 = vld [vmem:[#allocation2 + $0x418] sm:$0xff]
    %v191 = vld [vmem:[#allocation2 + $0x420] sm:$0xff]
    %v192 = vld [vmem:[#allocation2 + $0x428] sm:$0xff]
    %v193 = vld [vmem:[#allocation2 + $0x430] sm:$0xff]
    %v194 = vld [vmem:[#allocation2 + $0x438] sm:$0xff]
    %v195 = vld [vmem:[#allocation2 + $0x440] sm:$0xff]
    %v196 = vld [vmem:[#allocation2 + $0x448] sm:$0xff]
    %v197 = vld [vmem:[#allocation2 + $0x450] sm:$0xff]
    %v198 = vld [vmem:[#allocation2 + $0x458] sm:$0xff]
    %v199 = vld [vmem:[#allocation2 + $0x460] sm:$0xff]
    %v200 = vld [vmem:[#allocation2 + $0x468] sm:$0xff]
    %v201 = vld [vmem:[#allocation2 + $0x470] sm:$0xff]
    %v202 = vld [vmem:[#allocation2 + $0x478] sm:$0xff]
    %v203 = vld [vmem:[#allocation2 + $0x480] sm:$0xff]
    %v204 = vld [vmem:[#allocation2 + $0x488] sm:$0xff]
    %v205 = vld [vmem:[#allocation2 + $0x490] sm:$0xff]
    %v206 = vld [vmem:[#allocation2 + $0x498] sm:$0xff]
    %v207 = vld [vmem:[#allocation2 + $0x4a0] sm:$0xff]
    %v208 = vld [vmem:[#allocation2 + $0x4a8] sm:$0xff]
    %v209 = vld [vmem:[#allocation2 + $0x4b0] sm:$0xff]
    %v210 = vld [vmem:[#allocation2 + $0x4b8] sm:$0xff]
    %v211 = vld [vmem:[#allocation2 + $0x4c0] sm:$0xff]
    %v212 = vld [vmem:[#allocation2 + $0x4c8] sm:$0xff]
    %v213 = vld [vmem:[#allocation2 + $0x4d0] sm:$0xff]
    %v214 = vld [vmem:[#allocation2 + $0x4d8] sm:$0xff]
    %v215 = vld [vmem:[#allocation2 + $0x4e0] sm:$0xff]
    %v216 = vld [vmem:[#allocation2 + $0x4e8] sm:$0xff]
    %v217 = vld [vmem:[#allocation2 + $0x4f0] sm:$0xff]
    %v218 = vld [vmem:[#allocation2 + $0x4f8] sm:$0xff]
    %v219 = vld [vmem:[#allocation2 + $0x500] sm:$0xff]
    %v220 = vld [vmem:[#allocation2 + $0x508] sm:$0xff]
    %v221 = vld [vmem:[#allocation2 + $0x510] sm:$0xff]
    %v222 = vld [vmem:[#allocation2 + $0x518] sm:$0xff]
    %v223 = vld [vmem:[#allocation2 + $0x520] sm:$0xff]
    %v224 = vld [vmem:[#allocation2 + $0x528] sm:$0xff]
    %v225 = vld [vmem:[#allocation2 + $0x530] sm:$0xff]
    %v226 = vld [vmem:[#allocation2 + $0x538] sm:$0xff]
    %v227 = vld [vmem:[#allocation2 + $0x540] sm:$0xff]
    %v228 = vld [vmem:[#allocation2 + $0x548] sm:$0xff]
    %v229 = vld [vmem:[#allocation2 + $0x550] sm:$0xff]
    %v230 = vld [vmem:[#allocation2 + $0x558] sm:$0xff]
    %v231 = vld [vmem:[#allocation2 + $0x560] sm:$0xff]
    %v232 = vld [vmem:[#allocation2 + $0x568] sm:$0xff]
    %v233 = vld [vmem:[#allocation2 + $0x570] sm:$0xff]
    %v234 = vpack.c.bf16 %v66, %v59
    %v235 = vpack.c.bf16 %v67, %v60
    %v236 = vpack.c.bf16 %v68, %v61
    %v237 = vpack.c.bf16 %v69, %v62
    %v238 = vpack.c.bf16 %v70, %v63
    %v239 = vpack.c.bf16 %v71, %v64
    %v240 = vpack.c.bf16 %v72, %v65
    %v241 = vpack.c.bf16 %v80, %v73
    %v242 = vpack.c.bf16 %v81, %v74
    %v243 = vpack.c.bf16 %v82, %v75
    %v244 = vpack.c.bf16 %v83, %v76
    %v245 = vpack.c.bf16 %v84, %v77
    %v246 = vpack.c.bf16 %v85, %v78
    %v247 = vpack.c.bf16 %v86, %v79
    %v248 = vpack.c.bf16 %v94, %v87
    %v249 = vpack.c.bf16 %v95, %v88
    %v250 = vpack.c.bf16 %v96, %v89
    %v251 = vpack.c.bf16 %v97, %v90
    %v252 = vpack.c.bf16 %v98, %v91
    %v253 = vpack.c.bf16 %v99, %v92
    %v254 = vpack.c.bf16 %v100, %v93
    %v255 = vpack.c.bf16 %v108, %v101
    %v256 = vpack.c.bf16 %v109, %v102
    %v257 = vpack.c.bf16 %v110, %v103
    %v258 = vpack.c.bf16 %v111, %v104
    %v259 = vpack.c.bf16 %v112, %v105
    %v260 = vpack.c.bf16 %v113, %v106
    %v261 = vpack.c.bf16 %v114, %v107
    %v262 = vpack.c.bf16 %v122, %v115
    %v263 = vpack.c.bf16 %v123, %v116
    %v264 = vpack.c.bf16 %v124, %v117
    %v265 = vpack.c.bf16 %v125, %v118
    %v266 = vpack.c.bf16 %v126, %v119
    %v267 = vpack.c.bf16 %v127, %v120
    %v268 = vpack.c.bf16 %v128, %v121
    %v269 = vpack.c.bf16 %v136, %v129
    %v270 = vpack.c.bf16 %v137, %v130
    %v271 = vpack.c.bf16 %v138, %v131
    %v272 = vpack.c.bf16 %v139, %v132
    %v273 = vpack.c.bf16 %v140, %v133
    %v274 = vpack.c.bf16 %v141, %v134
    %v275 = vpack.c.bf16 %v142, %v135
    %v276 = vpack.c.bf16 %v150, %v143
    %v277 = vpack.c.bf16 %v151, %v144
    %v278 = vpack.c.bf16 %v152, %v145
    %v279 = vpack.c.bf16 %v153, %v146
    %v280 = vpack.c.bf16 %v154, %v147
    %v281 = vpack.c.bf16 %v155, %v148
    %v282 = vpack.c.bf16 %v156, %v149
    %v283 = vpack.c.bf16 %v164, %v157
    %v284 = vpack.c.bf16 %v165, %v158
    %v285 = vpack.c.bf16 %v166, %v159
    %v286 = vpack.c.bf16 %v167, %v160
    %v287 = vpack.c.bf16 %v168, %v161
    %v288 = vpack.c.bf16 %v169, %v162
    %v289 = vpack.c.bf16 %v170, %v163
    %v290 = vpack.c.bf16 %v178, %v171
    %v291 = vpack.c.bf16 %v179, %v172
    %v292 = vpack.c.bf16 %v180, %v173
    %v293 = vpack.c.bf16 %v181, %v174
    %v294 = vpack.c.bf16 %v182, %v175
    %v295 = vpack.c.bf16 %v183, %v176
    %v296 = vpack.c.bf16 %v184, %v177
    %v297 = vpack.c.bf16 %v192, %v185
    %v298 = vpack.c.bf16 %v193, %v186
    %v299 = vpack.c.bf16 %v194, %v187
    %v300 = vpack.c.bf16 %v195, %v188
    %v301 = vpack.c.bf16 %v196, %v189
    %v302 = vpack.c.bf16 %v197, %v190
    %v303 = vpack.c.bf16 %v198, %v191
    %v304 = vpack.c.bf16 %v206, %v199
    %v305 = vpack.c.bf16 %v207, %v200
    %v306 = vpack.c.bf16 %v208, %v201
    %v307 = vpack.c.bf16 %v209, %v202
    %v308 = vpack.c.bf16 %v210, %v203
    %v309 = vpack.c.bf16 %v211, %v204
    %v310 = vpack.c.bf16 %v212, %v205
    %v311 = vpack.c.bf16 %v220, %v213
    %v312 = vpack.c.bf16 %v221, %v214
    %v313 = vpack.c.bf16 %v222, %v215
    %v314 = vpack.c.bf16 %v223, %v216
    %v315 = vpack.c.bf16 %v224, %v217
    %v316 = vpack.c.bf16 %v225, %v218
    %v317 = vpack.c.bf16 %v226, %v219
    %v318 = vpack.c.bf16 %v227, %v227
    %v319 = vpack.c.bf16 %v228, %v228
    %v320 = vpack.c.bf16 %v229, %v229
    %v321 = vpack.c.bf16 %v230, %v230
    %v322 = vpack.c.bf16 %v231, %v231
    %v323 = vpack.c.bf16 %v232, %v232
    %v324 = vpack.c.bf16 %v233, %v233
    %v325 = vld [vmem:[#allocation4] sm:$0xf]
    %v326 = vld [vmem:[#allocation4 + $0x4] sm:$0xf]
    %v327 = vld [vmem:[#allocation4 + $0x8] sm:$0xf]
    %v328 = vld [vmem:[#allocation4 + $0xc] sm:$0xf]
    %v329 = vld [vmem:[#allocation4 + $0x10] sm:$0xf]
    %v330 = vld [vmem:[#allocation4 + $0x14] sm:$0xf]
    %v331 = vld [vmem:[#allocation4 + $0x18] sm:$0xf]
    %v332 = vld [vmem:[#allocation4 + $0x1c] sm:$0xf]
    %v333 = vld [vmem:[#allocation4 + $0x20] sm:$0xf]
    %v334 = vld [vmem:[#allocation4 + $0x24] sm:$0xf]
    %v335 = vld [vmem:[#allocation4 + $0x28] sm:$0xf]
    %v336 = vld [vmem:[#allocation4 + $0x2c] sm:$0xf]
    %v337 = vld [vmem:[#allocation4 + $0x30] sm:$0xf]
    %v338 = vld [vmem:[#allocation4 + $0x34] sm:$0xf]
    %v339 = vld [vmem:[#allocation4 + $0x38] sm:$0xf]
    %v340 = vld [vmem:[#allocation4 + $0x3c] sm:$0xf]
    %v341 = vld [vmem:[#allocation4 + $0x40] sm:$0xf]
    %v342 = vld [vmem:[#allocation4 + $0x44] sm:$0xf]
    %v343 = vld [vmem:[#allocation4 + $0x48] sm:$0xf]
    %v344 = vld [vmem:[#allocation4 + $0x4c] sm:$0xf]
    %v345 = vld [vmem:[#allocation4 + $0x50] sm:$0xf]
    %v346 = vld [vmem:[#allocation4 + $0x54] sm:$0xf]
    %v347 = vld [vmem:[#allocation4 + $0x58] sm:$0xf]
    %v348 = vld [vmem:[#allocation4 + $0x5c] sm:$0xf]
    %v349 = vld [vmem:[#allocation4 + $0x60] sm:$0xf]
    %v350 = vld [vmem:[#allocation4 + $0x64] sm:$0xf]
    %v351 = vld [vmem:[#allocation4 + $0x68] sm:$0xf]
    %v352 = vld [vmem:[#allocation4 + $0x6c] sm:$0xf]
    %v353 = vld [vmem:[#allocation4 + $0x70] sm:$0xf]
    %v354 = vld [vmem:[#allocation4 + $0x74] sm:$0xf]
    %v355 = vld [vmem:[#allocation4 + $0x78] sm:$0xf]
    %v356 = vld [vmem:[#allocation4 + $0x7c] sm:$0xf]
    %v357 = vld [vmem:[#allocation4 + $0x80] sm:$0xf]
    %v358 = vld [vmem:[#allocation4 + $0x84] sm:$0xf]
    %v359 = vld [vmem:[#allocation4 + $0x88] sm:$0xf]
    %v360 = vld [vmem:[#allocation4 + $0x8c] sm:$0xf]
    %v361 = vld [vmem:[#allocation4 + $0x90] sm:$0xf]
    %v362 = vld [vmem:[#allocation4 + $0x94] sm:$0xf]
    %v363 = vld [vmem:[#allocation4 + $0x98] sm:$0xf]
    %v364 = vld [vmem:[#allocation4 + $0x9c] sm:$0xf]
    %v365 = vld [vmem:[#allocation4 + $0xa0] sm:$0xf]
    %v366 = vld [vmem:[#allocation4 + $0xa4] sm:$0xf]
    %v367 = vld [vmem:[#allocation4 + $0xa8] sm:$0xf]
    %v368 = vld [vmem:[#allocation4 + $0xac] sm:$0xf]
    %v369 = vld [vmem:[#allocation4 + $0xb0] sm:$0xf]
    %v370 = vld [vmem:[#allocation4 + $0xb4] sm:$0xf]
    %v371 = vld [vmem:[#allocation4 + $0xb8] sm:$0xf]
    %v372 = vld [vmem:[#allocation4 + $0xbc] sm:$0xf]
    %v373 = vld [vmem:[#allocation4 + $0xc0] sm:$0xf]
    %v374 = vld [vmem:[#allocation4 + $0xc4] sm:$0xf]
    %v375 = vld [vmem:[#allocation4 + $0xc8] sm:$0xf]
    %v376 = vld [vmem:[#allocation4 + $0xcc] sm:$0xf]
    %v377 = vld [vmem:[#allocation4 + $0xd0] sm:$0xf]
    %v378 = vld [vmem:[#allocation4 + $0xd4] sm:$0xf]
    %v379 = vld [vmem:[#allocation4 + $0xd8] sm:$0xf]
    %v380 = vld [vmem:[#allocation4 + $0xdc] sm:$0xf]
    %v381 = vld [vmem:[#allocation4 + $0xe0] sm:$0xf]
    %v382 = vld [vmem:[#allocation4 + $0xe4] sm:$0xf]
    %v383 = vld [vmem:[#allocation4 + $0xe8] sm:$0xf]
    %v384 = vld [vmem:[#allocation4 + $0xec] sm:$0xf]
    %v385 = vld [vmem:[#allocation4 + $0xf0] sm:$0xf]
    %v386 = vld [vmem:[#allocation4 + $0xf4] sm:$0xf]
    %v387 = vld [vmem:[#allocation4 + $0xf8] sm:$0xf]
    %v388 = vld [vmem:[#allocation4 + $0xfc] sm:$0xf]
    %v389 = vld [vmem:[#allocation4 + $0x100] sm:$0xf]
    %v390 = vld [vmem:[#allocation4 + $0x104] sm:$0xf]
    %v391 = vld [vmem:[#allocation4 + $0x108] sm:$0xf]
    %v392 = vld [vmem:[#allocation4 + $0x10c] sm:$0xf]
    %v393 = vld [vmem:[#allocation4 + $0x110] sm:$0xf]
    %v394 = vld [vmem:[#allocation4 + $0x114] sm:$0xf]
    %v395 = vld [vmem:[#allocation4 + $0x118] sm:$0xf]
    %v396 = vld [vmem:[#allocation4 + $0x11c] sm:$0xf]
    %v397 = vld [vmem:[#allocation4 + $0x120] sm:$0xf]
    %v398 = vld [vmem:[#allocation4 + $0x124] sm:$0xf]
    %v399 = vld [vmem:[#allocation4 + $0x128] sm:$0xf]
    %v400 = vld [vmem:[#allocation4 + $0x12c] sm:$0xf]
    %v401 = vld [vmem:[#allocation4 + $0x130] sm:$0xf]
    %v402 = vld [vmem:[#allocation4 + $0x134] sm:$0xf]
    %v403 = vld [vmem:[#allocation4 + $0x138] sm:$0xf]
    %v404 = vld [vmem:[#allocation4 + $0x13c] sm:$0xf]
    %v405 = vld [vmem:[#allocation4 + $0x140] sm:$0xf]
    %v406 = vld [vmem:[#allocation4 + $0x144] sm:$0xf]
    %v407 = vld [vmem:[#allocation4 + $0x148] sm:$0xf]
    %v408 = vld [vmem:[#allocation4 + $0x14c] sm:$0xf]
    %v409 = vld [vmem:[#allocation4 + $0x150] sm:$0xf]
    %v410 = vld [vmem:[#allocation4 + $0x154] sm:$0xf]
    %v411 = vld [vmem:[#allocation4 + $0x158] sm:$0xf]
    %v412 = vld [vmem:[#allocation4 + $0x15c] sm:$0xf]
    %v413 = vld [vmem:[#allocation4 + $0x160] sm:$0xf]
    %v414 = vld [vmem:[#allocation4 + $0x164] sm:$0xf]
    %v415 = vld [vmem:[#allocation4 + $0x168] sm:$0xf]
    %v416 = vld [vmem:[#allocation4 + $0x16c] sm:$0xf]
    %v417 = vld [vmem:[#allocation4 + $0x170] sm:$0xf]
    %v418 = vld [vmem:[#allocation4 + $0x174] sm:$0xf]
    %v419 = vld [vmem:[#allocation4 + $0x178] sm:$0xf]
    %v420 = vld [vmem:[#allocation4 + $0x17c] sm:$0xf]
    %v421 = vld [vmem:[#allocation4 + $0x180] sm:$0xf]
    %v422 = vld [vmem:[#allocation4 + $0x184] sm:$0xf]
    %v423 = vld [vmem:[%s2] sm:$0x1]
    %v425 = vperm.slane %v423, 0
    %v525 = vunpack.c.l.b16 %v325
    %v526 = vunpack.c.l.b16 %v326
    %v527 = vunpack.c.l.b16 %v327
    %v528 = vunpack.c.l.b16 %v328
    %v529 = vunpack.c.l.b16 %v329
    %v530 = vunpack.c.l.b16 %v330
    %v531 = vunpack.c.l.b16 %v331
    %v532 = vunpack.c.l.b16 %v332
    %v533 = vunpack.c.l.b16 %v333
    %v534 = vunpack.c.l.b16 %v334
    %v535 = vunpack.c.l.b16 %v335
    %v536 = vunpack.c.l.b16 %v336
    %v537 = vunpack.c.l.b16 %v337
    %v538 = vunpack.c.l.b16 %v338
    %v539 = vunpack.c.l.b16 %v339
    %v540 = vunpack.c.l.b16 %v340
    %v541 = vunpack.c.l.b16 %v341
    %v542 = vunpack.c.l.b16 %v342
    %v543 = vunpack.c.l.b16 %v343
    %v544 = vunpack.c.l.b16 %v344
    %v545 = vunpack.c.l.b16 %v345
    %v546 = vunpack.c.l.b16 %v346
    %v547 = vunpack.c.l.b16 %v347
    %v548 = vunpack.c.l.b16 %v348
    %v549 = vunpack.c.l.b16 %v349
    %v550 = vunpack.c.l.b16 %v350
    %v551 = vunpack.c.l.b16 %v351
    %v552 = vunpack.c.l.b16 %v352
    %v553 = vunpack.c.l.b16 %v353
    %v554 = vunpack.c.l.b16 %v354
    %v555 = vunpack.c.l.b16 %v355
    %v556 = vunpack.c.l.b16 %v356
    %v557 = vunpack.c.l.b16 %v357
    %v558 = vunpack.c.l.b16 %v358
    %v559 = vunpack.c.l.b16 %v359
    %v560 = vunpack.c.l.b16 %v360
    %v561 = vunpack.c.l.b16 %v361
    %v562 = vunpack.c.l.b16 %v362
    %v563 = vunpack.c.l.b16 %v363
    %v564 = vunpack.c.l.b16 %v364
    %v565 = vunpack.c.l.b16 %v365
    %v566 = vunpack.c.l.b16 %v366
    %v567 = vunpack.c.l.b16 %v367
    %v568 = vunpack.c.l.b16 %v368
    %v569 = vunpack.c.l.b16 %v369
    %v570 = vunpack.c.l.b16 %v370
    %v571 = vunpack.c.l.b16 %v371
    %v572 = vunpack.c.l.b16 %v372
    %v573 = vunpack.c.l.b16 %v373
    %v574 = vunpack.c.l.b16 %v374
    %v575 = vunpack.c.l.b16 %v375
    %v576 = vunpack.c.l.b16 %v376
    %v577 = vunpack.c.l.b16 %v377
    %v578 = vunpack.c.l.b16 %v378
    %v579 = vunpack.c.l.b16 %v379
    %v580 = vunpack.c.l.b16 %v380
    %v581 = vunpack.c.l.b16 %v381
    %v582 = vunpack.c.l.b16 %v382
    %v583 = vunpack.c.l.b16 %v383
    %v584 = vunpack.c.l.b16 %v384
    %v585 = vunpack.c.l.b16 %v385
    %v586 = vunpack.c.l.b16 %v386
    %v587 = vunpack.c.l.b16 %v387
    %v588 = vunpack.c.l.b16 %v388
    %v589 = vunpack.c.l.b16 %v389
    %v590 = vunpack.c.l.b16 %v390
    %v591 = vunpack.c.l.b16 %v391
    %v592 = vunpack.c.l.b16 %v392
    %v593 = vunpack.c.l.b16 %v393
    %v594 = vunpack.c.l.b16 %v394
    %v595 = vunpack.c.l.b16 %v395
    %v596 = vunpack.c.l.b16 %v396
    %v597 = vunpack.c.l.b16 %v397
    %v598 = vunpack.c.l.b16 %v398
    %v599 = vunpack.c.l.b16 %v399
    %v600 = vunpack.c.l.b16 %v400
    %v601 = vunpack.c.l.b16 %v401
    %v602 = vunpack.c.l.b16 %v402
    %v603 = vunpack.c.l.b16 %v403
    %v604 = vunpack.c.l.b16 %v404
    %v605 = vunpack.c.l.b16 %v405
    %v606 = vunpack.c.l.b16 %v406
    %v607 = vunpack.c.l.b16 %v407
    %v608 = vunpack.c.l.b16 %v408
    %v609 = vunpack.c.l.b16 %v409
    %v610 = vunpack.c.l.b16 %v410
    %v611 = vunpack.c.l.b16 %v411
    %v612 = vunpack.c.l.b16 %v412
    %v613 = vunpack.c.l.b16 %v413
    %v614 = vunpack.c.l.b16 %v414
    %v615 = vunpack.c.l.b16 %v415
    %v616 = vunpack.c.l.b16 %v416
    %v617 = vunpack.c.l.b16 %v417
    %v618 = vunpack.c.l.b16 %v418
    %v619 = vunpack.c.l.b16 %v419
    %v620 = vunpack.c.l.b16 %v420
    %v621 = vunpack.c.l.b16 %v421
    %v622 = vunpack.c.l.b16 %v422
    %v623 = vpack.c.b16 %v526, %v525
    %v624 = vpack.c.b16 %v528, %v527
    %v625 = vpack.c.b16 %v530, %v529
    %v626 = vpack.c.b16 %v532, %v531
    %v627 = vpack.c.b16 %v534, %v533
    %v628 = vpack.c.b16 %v536, %v535
    %v629 = vpack.c.b16 %v538, %v537
    %v630 = vpack.c.b16 %v540, %v539
    %v631 = vpack.c.b16 %v542, %v541
    %v632 = vpack.c.b16 %v544, %v543
    %v633 = vpack.c.b16 %v546, %v545
    %v634 = vpack.c.b16 %v548, %v547
    %v635 = vpack.c.b16 %v550, %v549
    %v636 = vpack.c.b16 %v552, %v551
    %v637 = vpack.c.b16 %v554, %v553
    %v638 = vpack.c.b16 %v556, %v555
    %v639 = vpack.c.b16 %v558, %v557
    %v640 = vpack.c.b16 %v560, %v559
    %v641 = vpack.c.b16 %v562, %v561
    %v642 = vpack.c.b16 %v564, %v563
    %v643 = vpack.c.b16 %v566, %v565
    %v644 = vpack.c.b16 %v568, %v567
    %v645 = vpack.c.b16 %v570, %v569
    %v646 = vpack.c.b16 %v572, %v571
    %v647 = vpack.c.b16 %v574, %v573
    %v648 = vpack.c.b16 %v576, %v575
    %v649 = vpack.c.b16 %v578, %v577
    %v650 = vpack.c.b16 %v580, %v579
    %v651 = vpack.c.b16 %v582, %v581
    %v652 = vpack.c.b16 %v584, %v583
    %v653 = vpack.c.b16 %v586, %v585
    %v654 = vpack.c.b16 %v588, %v587
    %v655 = vpack.c.b16 %v590, %v589
    %v656 = vpack.c.b16 %v592, %v591
    %v657 = vpack.c.b16 %v594, %v593
    %v658 = vpack.c.b16 %v596, %v595
    %v659 = vpack.c.b16 %v598, %v597
    %v660 = vpack.c.b16 %v600, %v599
    %v661 = vpack.c.b16 %v602, %v601
    %v662 = vpack.c.b16 %v604, %v603
    %v663 = vpack.c.b16 %v606, %v605
    %v664 = vpack.c.b16 %v608, %v607
    %v665 = vpack.c.b16 %v610, %v609
    %v666 = vpack.c.b16 %v612, %v611
    %v667 = vpack.c.b16 %v614, %v613
    %v668 = vpack.c.b16 %v616, %v615
    %v669 = vpack.c.b16 %v618, %v617
    %v670 = vpack.c.b16 %v620, %v619
    %v671 = vpack.c.b16 %v622, %v621
    %vm721 = vcmask 130048
    %v723 = vsel %vm721, %v240, 0
    %v726 = vsel %vm721, %v247, 0
    %v729 = vsel %vm721, %v254, 0
    %v732 = vsel %vm721, %v261, 0
    %v735 = vsel %vm721, %v268, 0
    %v738 = vsel %vm721, %v275, 0
    %v741 = vsel %vm721, %v282, 0
    %v744 = vsel %vm721, %v289, 0
    %v747 = vsel %vm721, %v296, 0
    %v750 = vsel %vm721, %v303, 0
    %v753 = vsel %vm721, %v310, 0
    %v756 = vsel %vm721, %v317, 0
    %v759 = vsel %vm721, %v324, 0
    %761 = vmatpush.bf16.msra.mxu0 %v630
    %762 = vmatpush.bf16.msra.mxu0 %v629
    %763 = vmatpush.bf16.msra.mxu0 %v628
    %764 = vmatpush.bf16.msra.mxu0 %v627
    %765 = vmatpush.bf16.msra.mxu0 %v626
    %766 = vmatpush.bf16.msra.mxu0 %v625
    %767 = vmatpush.bf16.msra.mxu0 %v624
    %768 = vmatpush.bf16.msra.mxu0 %v623
    %769 = vmatmul.bf16.gmra.mxu0 %v234
    %v770 = vpop.f32.mrf.mxu0
    %v771 = vadd.f32 %v425, %v770
    %v772 = vpop.f32.mrf.mxu0
    %v773 = vadd.f32 %v425, %v772
    %774 = vmatmul.bf16.gmra.mxu0 %v241
    %v775 = vpop.f32.mrf.mxu0
    %v776 = vadd.f32 %v425, %v775
    %v777 = vpop.f32.mrf.mxu0
    %v778 = vadd.f32 %v425, %v777
    %779 = vmatmul.bf16.gmra.mxu0 %v248
    %v780 = vpop.f32.mrf.mxu0
    %v781 = vadd.f32 %v425, %v780
    %v782 = vpop.f32.mrf.mxu0
    %v783 = vadd.f32 %v425, %v782
    %784 = vmatmul.bf16.gmra.mxu0 %v255
    %v785 = vpop.f32.mrf.mxu0
    %v786 = vadd.f32 %v425, %v785
    %v787 = vpop.f32.mrf.mxu0
    %v788 = vadd.f32 %v425, %v787
    %789 = vmatmul.bf16.gmra.mxu0 %v262
    %v790 = vpop.f32.mrf.mxu0
    %v791 = vadd.f32 %v425, %v790
    %v792 = vpop.f32.mrf.mxu0
    %v793 = vadd.f32 %v425, %v792
    %794 = vmatmul.bf16.gmra.mxu0 %v269
    %v795 = vpop.f32.mrf.mxu0
    %v796 = vadd.f32 %v425, %v795
    %v797 = vpop.f32.mrf.mxu0
    %v798 = vadd.f32 %v425, %v797
    %799 = vmatmul.bf16.gmra.mxu0 %v276
    %v800 = vpop.f32.mrf.mxu0
    %v801 = vadd.f32 %v425, %v800
    %v802 = vpop.f32.mrf.mxu0
    %v803 = vadd.f32 %v425, %v802
    %804 = vmatmul.bf16.gmra.mxu0 %v283
    %v805 = vpop.f32.mrf.mxu0
    %v806 = vadd.f32 %v425, %v805
    %v807 = vpop.f32.mrf.mxu0
    %v808 = vadd.f32 %v425, %v807
    %809 = vmatmul.bf16.gmra.mxu0 %v290
    %v810 = vpop.f32.mrf.mxu0
    %v811 = vadd.f32 %v425, %v810
    %v812 = vpop.f32.mrf.mxu0
    %v813 = vadd.f32 %v425, %v812
    %814 = vmatmul.bf16.gmra.mxu0 %v297
    %v815 = vpop.f32.mrf.mxu0
    %v816 = vadd.f32 %v425, %v815
    %v817 = vpop.f32.mrf.mxu0
    %v818 = vadd.f32 %v425, %v817
    %819 = vmatmul.bf16.gmra.mxu0 %v304
    %v820 = vpop.f32.mrf.mxu0
    %v821 = vadd.f32 %v425, %v820
    %v822 = vpop.f32.mrf.mxu0
    %v823 = vadd.f32 %v425, %v822
    %824 = vmatmul.bf16.gmra.mxu0 %v311
    %v825 = vpop.f32.mrf.mxu0
    %v826 = vadd.f32 %v425, %v825
    %v827 = vpop.f32.mrf.mxu0
    %v828 = vadd.f32 %v425, %v827
    %829 = vmatmul.bf16.gmra.mxu0 %v318
    %v830 = vpop.f32.mrf.mxu0
    %v831 = vadd.f32 %v425, %v830
    %v832 = vpop.f32.mrf.mxu0
    %833 = vdwg.mxu0
    %834 = vmatpush.bf16.msra.mxu0 %v638
    %835 = vmatpush.bf16.msra.mxu0 %v637
    %836 = vmatpush.bf16.msra.mxu0 %v636
    %837 = vmatpush.bf16.msra.mxu0 %v635
    %838 = vmatpush.bf16.msra.mxu0 %v634
    %839 = vmatpush.bf16.msra.mxu0 %v633
    %840 = vmatpush.bf16.msra.mxu0 %v632
    %841 = vmatpush.bf16.msra.mxu0 %v631
    %842 = vmatmul.bf16.gmra.mxu0 %v235
    %v843 = vpop.f32.mrf.mxu0
    %v844 = vadd.f32 %v771, %v843
    %v845 = vpop.f32.mrf.mxu0
    %v846 = vadd.f32 %v773, %v845
    %847 = vmatmul.bf16.gmra.mxu0 %v242
    %v848 = vpop.f32.mrf.mxu0
    %v849 = vadd.f32 %v776, %v848
    %v850 = vpop.f32.mrf.mxu0
    %v851 = vadd.f32 %v778, %v850
    %852 = vmatmul.bf16.gmra.mxu0 %v249
    %v853 = vpop.f32.mrf.mxu0
    %v854 = vadd.f32 %v781, %v853
    %v855 = vpop.f32.mrf.mxu0
    %v856 = vadd.f32 %v783, %v855
    %857 = vmatmul.bf16.gmra.mxu0 %v256
    %v858 = vpop.f32.mrf.mxu0
    %v859 = vadd.f32 %v786, %v858
    %v860 = vpop.f32.mrf.mxu0
    %v861 = vadd.f32 %v788, %v860
    %862 = vmatmul.bf16.gmra.mxu0 %v263
    %v863 = vpop.f32.mrf.mxu0
    %v864 = vadd.f32 %v791, %v863
    %v865 = vpop.f32.mrf.mxu0
    %v866 = vadd.f32 %v793, %v865
    %867 = vmatmul.bf16.gmra.mxu0 %v270
    %v868 = vpop.f32.mrf.mxu0
    %v869 = vadd.f32 %v796, %v868
    %v870 = vpop.f32.mrf.mxu0
    %v871 = vadd.f32 %v798, %v870
    %872 = vmatmul.bf16.gmra.mxu0 %v277
    %v873 = vpop.f32.mrf.mxu0
    %v874 = vadd.f32 %v801, %v873
    %v875 = vpop.f32.mrf.mxu0
    %v876 = vadd.f32 %v803, %v875
    %877 = vmatmul.bf16.gmra.mxu0 %v284
    %v878 = vpop.f32.mrf.mxu0
    %v879 = vadd.f32 %v806, %v878
    %v880 = vpop.f32.mrf.mxu0
    %v881 = vadd.f32 %v808, %v880
    %882 = vmatmul.bf16.gmra.mxu0 %v291
    %v883 = vpop.f32.mrf.mxu0
    %v884 = vadd.f32 %v811, %v883
    %v885 = vpop.f32.mrf.mxu0
    %v886 = vadd.f32 %v813, %v885
    %887 = vmatmul.bf16.gmra.mxu0 %v298
    %v888 = vpop.f32.mrf.mxu0
    %v889 = vadd.f32 %v816, %v888
    %v890 = vpop.f32.mrf.mxu0
    %v891 = vadd.f32 %v818, %v890
    %892 = vmatmul.bf16.gmra.mxu0 %v305
    %v893 = vpop.f32.mrf.mxu0
    %v894 = vadd.f32 %v821, %v893
    %v895 = vpop.f32.mrf.mxu0
    %v896 = vadd.f32 %v823, %v895
    %897 = vmatmul.bf16.gmra.mxu0 %v312
    %v898 = vpop.f32.mrf.mxu0
    %v899 = vadd.f32 %v826, %v898
    %v900 = vpop.f32.mrf.mxu0
    %v901 = vadd.f32 %v828, %v900
    %902 = vmatmul.bf16.gmra.mxu0 %v319
    %v903 = vpop.f32.mrf.mxu0
    %v904 = vadd.f32 %v831, %v903
    %v905 = vpop.f32.mrf.mxu0
    %906 = vdwg.mxu0
    %907 = vmatpush.bf16.msra.mxu0 %v646
    %908 = vmatpush.bf16.msra.mxu0 %v645
    %909 = vmatpush.bf16.msra.mxu0 %v644
    %910 = vmatpush.bf16.msra.mxu0 %v643
    %911 = vmatpush.bf16.msra.mxu0 %v642
    %912 = vmatpush.bf16.msra.mxu0 %v641
    %913 = vmatpush.bf16.msra.mxu0 %v640
    %914 = vmatpush.bf16.msra.mxu0 %v639
    %915 = vmatmul.bf16.gmra.mxu0 %v236
    %v916 = vpop.f32.mrf.mxu0
    %v917 = vadd.f32 %v844, %v916
    %v918 = vpop.f32.mrf.mxu0
    %v919 = vadd.f32 %v846, %v918
    %920 = vmatmul.bf16.gmra.mxu0 %v243
    %v921 = vpop.f32.mrf.mxu0
    %v922 = vadd.f32 %v849, %v921
    %v923 = vpop.f32.mrf.mxu0
    %v924 = vadd.f32 %v851, %v923
    %925 = vmatmul.bf16.gmra.mxu0 %v250
    %v926 = vpop.f32.mrf.mxu0
    %v927 = vadd.f32 %v854, %v926
    %v928 = vpop.f32.mrf.mxu0
    %v929 = vadd.f32 %v856, %v928
    %930 = vmatmul.bf16.gmra.mxu0 %v257
    %v931 = vpop.f32.mrf.mxu0
    %v932 = vadd.f32 %v859, %v931
    %v933 = vpop.f32.mrf.mxu0
    %v934 = vadd.f32 %v861, %v933
    %935 = vmatmul.bf16.gmra.mxu0 %v264
    %v936 = vpop.f32.mrf.mxu0
    %v937 = vadd.f32 %v864, %v936
    %v938 = vpop.f32.mrf.mxu0
    %v939 = vadd.f32 %v866, %v938
    %940 = vmatmul.bf16.gmra.mxu0 %v271
    %v941 = vpop.f32.mrf.mxu0
    %v942 = vadd.f32 %v869, %v941
    %v943 = vpop.f32.mrf.mxu0
    %v944 = vadd.f32 %v871, %v943
    %945 = vmatmul.bf16.gmra.mxu0 %v278
    %v946 = vpop.f32.mrf.mxu0
    %v947 = vadd.f32 %v874, %v946
    %v948 = vpop.f32.mrf.mxu0
    %v949 = vadd.f32 %v876, %v948
    %950 = vmatmul.bf16.gmra.mxu0 %v285
    %v951 = vpop.f32.mrf.mxu0
    %v952 = vadd.f32 %v879, %v951
    %v953 = vpop.f32.mrf.mxu0
    %v954 = vadd.f32 %v881, %v953
    %955 = vmatmul.bf16.gmra.mxu0 %v292
    %v956 = vpop.f32.mrf.mxu0
    %v957 = vadd.f32 %v884, %v956
    %v958 = vpop.f32.mrf.mxu0
    %v959 = vadd.f32 %v886, %v958
    %960 = vmatmul.bf16.gmra.mxu0 %v299
    %v961 = vpop.f32.mrf.mxu0
    %v962 = vadd.f32 %v889, %v961
    %v963 = vpop.f32.mrf.mxu0
    %v964 = vadd.f32 %v891, %v963
    %965 = vmatmul.bf16.gmra.mxu0 %v306
    %v966 = vpop.f32.mrf.mxu0
    %v967 = vadd.f32 %v894, %v966
    %v968 = vpop.f32.mrf.mxu0
    %v969 = vadd.f32 %v896, %v968
    %970 = vmatmul.bf16.gmra.mxu0 %v313
    %v971 = vpop.f32.mrf.mxu0
    %v972 = vadd.f32 %v899, %v971
    %v973 = vpop.f32.mrf.mxu0
    %v974 = vadd.f32 %v901, %v973
    %975 = vmatmul.bf16.gmra.mxu0 %v320
    %v976 = vpop.f32.mrf.mxu0
    %v977 = vadd.f32 %v904, %v976
    %v978 = vpop.f32.mrf.mxu0
    %979 = vdwg.mxu0
    %980 = vmatpush.bf16.msra.mxu0 %v654
    %981 = vmatpush.bf16.msra.mxu0 %v653
    %982 = vmatpush.bf16.msra.mxu0 %v652
    %983 = vmatpush.bf16.msra.mxu0 %v651
    %984 = vmatpush.bf16.msra.mxu0 %v650
    %985 = vmatpush.bf16.msra.mxu0 %v649
    %986 = vmatpush.bf16.msra.mxu0 %v648
    %987 = vmatpush.bf16.msra.mxu0 %v647
    %988 = vmatmul.bf16.gmra.mxu0 %v237
    %v989 = vpop.f32.mrf.mxu0
    %v990 = vadd.f32 %v917, %v989
    %v991 = vpop.f32.mrf.mxu0
    %v992 = vadd.f32 %v919, %v991
    %993 = vmatmul.bf16.gmra.mxu0 %v244
    %v994 = vpop.f32.mrf.mxu0
    %v995 = vadd.f32 %v922, %v994
    %v996 = vpop.f32.mrf.mxu0
    %v997 = vadd.f32 %v924, %v996
    %998 = vmatmul.bf16.gmra.mxu0 %v251
    %v999 = vpop.f32.mrf.mxu0
    %v1000 = vadd.f32 %v927, %v999
    %v1001 = vpop.f32.mrf.mxu0
    %v1002 = vadd.f32 %v929, %v1001
    %1003 = vmatmul.bf16.gmra.mxu0 %v258
    %v1004 = vpop.f32.mrf.mxu0
    %v1005 = vadd.f32 %v932, %v1004
    %v1006 = vpop.f32.mrf.mxu0
    %v1007 = vadd.f32 %v934, %v1006
    %1008 = vmatmul.bf16.gmra.mxu0 %v265
    %v1009 = vpop.f32.mrf.mxu0
    %v1010 = vadd.f32 %v937, %v1009
    %v1011 = vpop.f32.mrf.mxu0
    %v1012 = vadd.f32 %v939, %v1011
    %1013 = vmatmul.bf16.gmra.mxu0 %v272
    %v1014 = vpop.f32.mrf.mxu0
    %v1015 = vadd.f32 %v942, %v1014
    %v1016 = vpop.f32.mrf.mxu0
    %v1017 = vadd.f32 %v944, %v1016
    %1018 = vmatmul.bf16.gmra.mxu0 %v279
    %v1019 = vpop.f32.mrf.mxu0
    %v1020 = vadd.f32 %v947, %v1019
    %v1021 = vpop.f32.mrf.mxu0
    %v1022 = vadd.f32 %v949, %v1021
    %1023 = vmatmul.bf16.gmra.mxu0 %v286
    %v1024 = vpop.f32.mrf.mxu0
    %v1025 = vadd.f32 %v952, %v1024
    %v1026 = vpop.f32.mrf.mxu0
    %v1027 = vadd.f32 %v954, %v1026
    %1028 = vmatmul.bf16.gmra.mxu0 %v293
    %v1029 = vpop.f32.mrf.mxu0
    %v1030 = vadd.f32 %v957, %v1029
    %v1031 = vpop.f32.mrf.mxu0
    %v1032 = vadd.f32 %v959, %v1031
    %1033 = vmatmul.bf16.gmra.mxu0 %v300
    %v1034 = vpop.f32.mrf.mxu0
    %v1035 = vadd.f32 %v962, %v1034
    %v1036 = vpop.f32.mrf.mxu0
    %v1037 = vadd.f32 %v964, %v1036
    %1038 = vmatmul.bf16.gmra.mxu0 %v307
    %v1039 = vpop.f32.mrf.mxu0
    %v1040 = vadd.f32 %v967, %v1039
    %v1041 = vpop.f32.mrf.mxu0
    %v1042 = vadd.f32 %v969, %v1041
    %1043 = vmatmul.bf16.gmra.mxu0 %v314
    %v1044 = vpop.f32.mrf.mxu0
    %v1045 = vadd.f32 %v972, %v1044
    %v1046 = vpop.f32.mrf.mxu0
    %v1047 = vadd.f32 %v974, %v1046
    %1048 = vmatmul.bf16.gmra.mxu0 %v321
    %v1049 = vpop.f32.mrf.mxu0
    %v1050 = vadd.f32 %v977, %v1049
    %v1051 = vpop.f32.mrf.mxu0
    %1052 = vdwg.mxu0
    %1053 = vmatpush.bf16.msra.mxu0 %v662
    %1054 = vmatpush.bf16.msra.mxu0 %v661
    %1055 = vmatpush.bf16.msra.mxu0 %v660
    %1056 = vmatpush.bf16.msra.mxu0 %v659
    %1057 = vmatpush.bf16.msra.mxu0 %v658
    %1058 = vmatpush.bf16.msra.mxu0 %v657
    %1059 = vmatpush.bf16.msra.mxu0 %v656
    %1060 = vmatpush.bf16.msra.mxu0 %v655
    %1061 = vmatmul.bf16.gmra.mxu0 %v238
    %v1062 = vpop.f32.mrf.mxu0
    %v1063 = vadd.f32 %v990, %v1062
    %v1064 = vpop.f32.mrf.mxu0
    %v1065 = vadd.f32 %v992, %v1064
    %1066 = vmatmul.bf16.gmra.mxu0 %v245
    %v1067 = vpop.f32.mrf.mxu0
    %v1068 = vadd.f32 %v995, %v1067
    %v1069 = vpop.f32.mrf.mxu0
    %v1070 = vadd.f32 %v997, %v1069
    %1071 = vmatmul.bf16.gmra.mxu0 %v252
    %v1072 = vpop.f32.mrf.mxu0
    %v1073 = vadd.f32 %v1000, %v1072
    %v1074 = vpop.f32.mrf.mxu0
    %v1075 = vadd.f32 %v1002, %v1074
    %1076 = vmatmul.bf16.gmra.mxu0 %v259
    %v1077 = vpop.f32.mrf.mxu0
    %v1078 = vadd.f32 %v1005, %v1077
    %v1079 = vpop.f32.mrf.mxu0
    %v1080 = vadd.f32 %v1007, %v1079
    %1081 = vmatmul.bf16.gmra.mxu0 %v266
    %v1082 = vpop.f32.mrf.mxu0
    %v1083 = vadd.f32 %v1010, %v1082
    %v1084 = vpop.f32.mrf.mxu0
    %v1085 = vadd.f32 %v1012, %v1084
    %1086 = vmatmul.bf16.gmra.mxu0 %v273
    %v1087 = vpop.f32.mrf.mxu0
    %v1088 = vadd.f32 %v1015, %v1087
    %v1089 = vpop.f32.mrf.mxu0
    %v1090 = vadd.f32 %v1017, %v1089
    %1091 = vmatmul.bf16.gmra.mxu0 %v280
    %v1092 = vpop.f32.mrf.mxu0
    %v1093 = vadd.f32 %v1020, %v1092
    %v1094 = vpop.f32.mrf.mxu0
    %v1095 = vadd.f32 %v1022, %v1094
    %1096 = vmatmul.bf16.gmra.mxu0 %v287
    %v1097 = vpop.f32.mrf.mxu0
    %v1098 = vadd.f32 %v1025, %v1097
    %v1099 = vpop.f32.mrf.mxu0
    %v1100 = vadd.f32 %v1027, %v1099
    %1101 = vmatmul.bf16.gmra.mxu0 %v294
    %v1102 = vpop.f32.mrf.mxu0
    %v1103 = vadd.f32 %v1030, %v1102
    %v1104 = vpop.f32.mrf.mxu0
    %v1105 = vadd.f32 %v1032, %v1104
    %1106 = vmatmul.bf16.gmra.mxu0 %v301
    %v1107 = vpop.f32.mrf.mxu0
    %v1108 = vadd.f32 %v1035, %v1107
    %v1109 = vpop.f32.mrf.mxu0
    %v1110 = vadd.f32 %v1037, %v1109
    %1111 = vmatmul.bf16.gmra.mxu0 %v308
    %v1112 = vpop.f32.mrf.mxu0
    %v1113 = vadd.f32 %v1040, %v1112
    %v1114 = vpop.f32.mrf.mxu0
    %v1115 = vadd.f32 %v1042, %v1114
    %1116 = vmatmul.bf16.gmra.mxu0 %v315
    %v1117 = vpop.f32.mrf.mxu0
    %v1118 = vadd.f32 %v1045, %v1117
    %v1119 = vpop.f32.mrf.mxu0
    %v1120 = vadd.f32 %v1047, %v1119
    %1121 = vmatmul.bf16.gmra.mxu0 %v322
    %v1122 = vpop.f32.mrf.mxu0
    %v1123 = vadd.f32 %v1050, %v1122
    %v1124 = vpop.f32.mrf.mxu0
    %1125 = vdwg.mxu0
    %1126 = vmatpush.bf16.msra.mxu0 %v670
    %1127 = vmatpush.bf16.msra.mxu0 %v669
    %1128 = vmatpush.bf16.msra.mxu0 %v668
    %1129 = vmatpush.bf16.msra.mxu0 %v667
    %1130 = vmatpush.bf16.msra.mxu0 %v666
    %1131 = vmatpush.bf16.msra.mxu0 %v665
    %1132 = vmatpush.bf16.msra.mxu0 %v664
    %1133 = vmatpush.bf16.msra.mxu0 %v663
    %1134 = vmatmul.bf16.gmra.mxu0 %v239
    %v1135 = vpop.f32.mrf.mxu0
    %v1136 = vadd.f32 %v1063, %v1135
    %v1137 = vpop.f32.mrf.mxu0
    %v1138 = vadd.f32 %v1065, %v1137
    %1139 = vmatmul.bf16.gmra.mxu0 %v246
    %v1140 = vpop.f32.mrf.mxu0
    %v1141 = vadd.f32 %v1068, %v1140
    %v1142 = vpop.f32.mrf.mxu0
    %v1143 = vadd.f32 %v1070, %v1142
    %1144 = vmatmul.bf16.gmra.mxu0 %v253
    %v1145 = vpop.f32.mrf.mxu0
    %v1146 = vadd.f32 %v1073, %v1145
    %v1147 = vpop.f32.mrf.mxu0
    %v1148 = vadd.f32 %v1075, %v1147
    %1149 = vmatmul.bf16.gmra.mxu0 %v260
    %v1150 = vpop.f32.mrf.mxu0
    %v1151 = vadd.f32 %v1078, %v1150
    %v1152 = vpop.f32.mrf.mxu0
    %v1153 = vadd.f32 %v1080, %v1152
    %1154 = vmatmul.bf16.gmra.mxu0 %v267
    %v1155 = vpop.f32.mrf.mxu0
    %v1156 = vadd.f32 %v1083, %v1155
    %v1157 = vpop.f32.mrf.mxu0
    %v1158 = vadd.f32 %v1085, %v1157
    %1159 = vmatmul.bf16.gmra.mxu0 %v274
    %v1160 = vpop.f32.mrf.mxu0
    %v1161 = vadd.f32 %v1088, %v1160
    %v1162 = vpop.f32.mrf.mxu0
    %v1163 = vadd.f32 %v1090, %v1162
    %1164 = vmatmul.bf16.gmra.mxu0 %v281
    %v1165 = vpop.f32.mrf.mxu0
    %v1166 = vadd.f32 %v1093, %v1165
    %v1167 = vpop.f32.mrf.mxu0
    %v1168 = vadd.f32 %v1095, %v1167
    %1169 = vmatmul.bf16.gmra.mxu0 %v288
    %v1170 = vpop.f32.mrf.mxu0
    %v1171 = vadd.f32 %v1098, %v1170
    %v1172 = vpop.f32.mrf.mxu0
    %v1173 = vadd.f32 %v1100, %v1172
    %1174 = vmatmul.bf16.gmra.mxu0 %v295
    %v1175 = vpop.f32.mrf.mxu0
    %v1176 = vadd.f32 %v1103, %v1175
    %v1177 = vpop.f32.mrf.mxu0
    %v1178 = vadd.f32 %v1105, %v1177
    %1179 = vmatmul.bf16.gmra.mxu0 %v302
    %v1180 = vpop.f32.mrf.mxu0
    %v1181 = vadd.f32 %v1108, %v1180
    %v1182 = vpop.f32.mrf.mxu0
    %v1183 = vadd.f32 %v1110, %v1182
    %1184 = vmatmul.bf16.gmra.mxu0 %v309
    %v1185 = vpop.f32.mrf.mxu0
    %v1186 = vadd.f32 %v1113, %v1185
    %v1187 = vpop.f32.mrf.mxu0
    %v1188 = vadd.f32 %v1115, %v1187
    %1189 = vmatmul.bf16.gmra.mxu0 %v316
    %v1190 = vpop.f32.mrf.mxu0
    %v1191 = vadd.f32 %v1118, %v1190
    %v1192 = vpop.f32.mrf.mxu0
    %v1193 = vadd.f32 %v1120, %v1192
    %1194 = vmatmul.bf16.gmra.mxu0 %v323
    %v1195 = vpop.f32.mrf.mxu0
    %v1196 = vadd.f32 %v1123, %v1195
    %v1197 = vpop.f32.mrf.mxu0
    %1198 = vdwg.mxu0
    %1199 = vmatpush.bf16.msra.mxu0 0
    %1200 = vmatpush.bf16.msra.mxu0 0
    %1201 = vmatpush.bf16.msra.mxu0 0
    %1202 = vmatpush.bf16.msra.mxu0 0
    %1203 = vmatpush.bf16.msra.mxu0 0
    %1204 = vmatpush.bf16.msra.mxu0 0
    %1205 = vmatpush.bf16.msra.mxu0 0
    %1206 = vmatpush.bf16.msra.mxu0 %v671
    %1207 = vmatmul.bf16.gmra.mxu0 %v723
    %v1208 = vpop.f32.mrf.mxu0
    %v1209 = vadd.f32 %v1136, %v1208
    %v1210 = vpop.f32.mrf.mxu0
    %v1211 = vadd.f32 %v1138, %v1210
    %1212 = vmatmul.bf16.gmra.mxu0 %v726
    %v1213 = vpop.f32.mrf.mxu0
    %v1214 = vadd.f32 %v1141, %v1213
    %v1215 = vpop.f32.mrf.mxu0
    %v1216 = vadd.f32 %v1143, %v1215
    %1217 = vmatmul.bf16.gmra.mxu0 %v729
    %v1218 = vpop.f32.mrf.mxu0
    %v1219 = vadd.f32 %v1146, %v1218
    %v1220 = vpop.f32.mrf.mxu0
    %v1221 = vadd.f32 %v1148, %v1220
    %1222 = vmatmul.bf16.gmra.mxu0 %v732
    %v1223 = vpop.f32.mrf.mxu0
    %v1224 = vadd.f32 %v1151, %v1223
    %v1225 = vpop.f32.mrf.mxu0
    %v1226 = vadd.f32 %v1153, %v1225
    %1227 = vmatmul.bf16.gmra.mxu0 %v735
    %v1228 = vpop.f32.mrf.mxu0
    %v1229 = vadd.f32 %v1156, %v1228
    %v1230 = vpop.f32.mrf.mxu0
    %v1231 = vadd.f32 %v1158, %v1230
    %1232 = vmatmul.bf16.gmra.mxu0 %v738
    %v1233 = vpop.f32.mrf.mxu0
    %v1234 = vadd.f32 %v1161, %v1233
    %v1235 = vpop.f32.mrf.mxu0
    %v1236 = vadd.f32 %v1163, %v1235
    %1237 = vmatmul.bf16.gmra.mxu0 %v741
    %v1238 = vpop.f32.mrf.mxu0
    %v1239 = vadd.f32 %v1166, %v1238
    %v1240 = vpop.f32.mrf.mxu0
    %v1241 = vadd.f32 %v1168, %v1240
    %1242 = vmatmul.bf16.gmra.mxu0 %v744
    %v1243 = vpop.f32.mrf.mxu0
    %v1244 = vadd.f32 %v1171, %v1243
    %v1245 = vpop.f32.mrf.mxu0
    %v1246 = vadd.f32 %v1173, %v1245
    %1247 = vmatmul.bf16.gmra.mxu0 %v747
    %v1248 = vpop.f32.mrf.mxu0
    %v1249 = vadd.f32 %v1176, %v1248
    %v1250 = vpop.f32.mrf.mxu0
    %v1251 = vadd.f32 %v1178, %v1250
    %1252 = vmatmul.bf16.gmra.mxu0 %v750
    %v1253 = vpop.f32.mrf.mxu0
    %v1254 = vadd.f32 %v1181, %v1253
    %v1255 = vpop.f32.mrf.mxu0
    %v1256 = vadd.f32 %v1183, %v1255
    %1257 = vmatmul.bf16.gmra.mxu0 %v753
    %v1258 = vpop.f32.mrf.mxu0
    %v1259 = vadd.f32 %v1186, %v1258
    %v1260 = vpop.f32.mrf.mxu0
    %v1261 = vadd.f32 %v1188, %v1260
    %1262 = vmatmul.bf16.gmra.mxu0 %v756
    %v1263 = vpop.f32.mrf.mxu0
    %v1264 = vadd.f32 %v1191, %v1263
    %v1265 = vpop.f32.mrf.mxu0
    %v1266 = vadd.f32 %v1193, %v1265
    %1267 = vmatmul.bf16.gmra.mxu0 %v759
    %v1268 = vpop.f32.mrf.mxu0
    %v1269 = vadd.f32 %v1196, %v1268
    %v1270 = vpop.f32.mrf.mxu0
    %1271 = vdwg.mxu0
    %v1272 = vmax.f32 %v1209, 0.0
    %v1273 = vmax.f32 %v1211, 0.0
    %v1274 = vmax.f32 %v1214, 0.0
    %v1275 = vmax.f32 %v1216, 0.0
    %v1276 = vmax.f32 %v1219, 0.0
    %v1277 = vmax.f32 %v1221, 0.0
    %v1278 = vmax.f32 %v1224, 0.0
    %v1279 = vmax.f32 %v1226, 0.0
    %v1280 = vmax.f32 %v1229, 0.0
    %v1281 = vmax.f32 %v1231, 0.0
    %v1282 = vmax.f32 %v1234, 0.0
    %v1283 = vmax.f32 %v1236, 0.0
    %v1284 = vmax.f32 %v1239, 0.0
    %v1285 = vmax.f32 %v1241, 0.0
    %v1286 = vmax.f32 %v1244, 0.0
    %v1287 = vmax.f32 %v1246, 0.0
    %v1288 = vmax.f32 %v1249, 0.0
    %v1289 = vmax.f32 %v1251, 0.0
    %v1290 = vmax.f32 %v1254, 0.0
    %v1291 = vmax.f32 %v1256, 0.0
    %v1292 = vmax.f32 %v1259, 0.0
    %v1293 = vmax.f32 %v1261, 0.0
    %v1294 = vmax.f32 %v1264, 0.0
    %v1295 = vmax.f32 %v1266, 0.0
    %v1296 = vmax.f32 %v1269, 0.0
    %v1297 = vpack.c.bf16 %v1273, %v1272
    %v1298 = vpack.c.bf16 %v1275, %v1274
    %v1299 = vpack.c.bf16 %v1277, %v1276
    %v1300 = vpack.c.bf16 %v1279, %v1278
    %v1301 = vpack.c.bf16 %v1281, %v1280
    %v1302 = vpack.c.bf16 %v1283, %v1282
    %v1303 = vpack.c.bf16 %v1285, %v1284
    %v1304 = vpack.c.bf16 %v1287, %v1286
    %v1305 = vpack.c.bf16 %v1289, %v1288
    %v1306 = vpack.c.bf16 %v1291, %v1290
    %v1307 = vpack.c.bf16 %v1293, %v1292
    %v1308 = vpack.c.bf16 %v1295, %v1294
    %v1309 = vpack.c.bf16 %v1296, %v1296
    %v1310 = vld [vmem:[%s3] sm:$0xf]
    %v1311 = vld [vmem:[%s3 + $0x4] sm:$0xf]
    %v1312 = vld [vmem:[%s3 + $0x8] sm:$0xf]
    %v1313 = vld [vmem:[%s3 + $0xc] sm:$0xf]
    %v1314 = vld [vmem:[%s3 + $0x10] sm:$0xf]
    %v1315 = vld [vmem:[%s3 + $0x14] sm:$0xf]
    %v1316 = vld [vmem:[%s3 + $0x18] sm:$0xf]
    %v1317 = vld [vmem:[%s3 + $0x1c] sm:$0xf]
    %v1318 = vld [vmem:[%s3 + $0x20] sm:$0xf]
    %v1319 = vld [vmem:[%s3 + $0x24] sm:$0xf]
    %v1320 = vld [vmem:[%s3 + $0x28] sm:$0xf]
    %v1321 = vld [vmem:[%s3 + $0x2c] sm:$0xf]
    %v1322 = vld [vmem:[%s3 + $0x30] sm:$0xf]
    %v1323 = vld [vmem:[%s3 + $0x34] sm:$0xf]
    %v1324 = vld [vmem:[%s3 + $0x38] sm:$0xf]
    %v1325 = vld [vmem:[%s3 + $0x3c] sm:$0xf]
    %v1326 = vld [vmem:[%s4] sm:$0x1]
    %v1328 = vperm.slane %v1326, 0
    %v1346 = vunpack.c.l.b16 %v1310
    %v1347 = vunpack.c.l.b16 %v1311
    %v1348 = vunpack.c.l.b16 %v1312
    %v1349 = vunpack.c.l.b16 %v1313
    %v1350 = vunpack.c.l.b16 %v1314
    %v1351 = vunpack.c.l.b16 %v1315
    %v1352 = vunpack.c.l.b16 %v1316
    %v1353 = vunpack.c.l.b16 %v1317
    %v1354 = vunpack.c.l.b16 %v1318
    %v1355 = vunpack.c.l.b16 %v1319
    %v1356 = vunpack.c.l.b16 %v1320
    %v1357 = vunpack.c.l.b16 %v1321
    %v1358 = vunpack.c.l.b16 %v1322
    %v1359 = vunpack.c.l.b16 %v1323
    %v1360 = vunpack.c.l.b16 %v1324
    %v1361 = vunpack.c.l.b16 %v1325
    %v1362 = vpack.c.b16 %v1347, %v1346
    %v1363 = vpack.c.b16 %v1349, %v1348
    %v1364 = vpack.c.b16 %v1351, %v1350
    %v1365 = vpack.c.b16 %v1353, %v1352
    %v1366 = vpack.c.b16 %v1355, %v1354
    %v1367 = vpack.c.b16 %v1357, %v1356
    %v1368 = vpack.c.b16 %v1359, %v1358
    %v1369 = vpack.c.b16 %v1361, %v1360
    %1378 = vmatpush.bf16.msra.mxu0 %v1369
    %1379 = vmatpush.bf16.msra.mxu0 %v1368
    %1380 = vmatpush.bf16.msra.mxu0 %v1367
    %1381 = vmatpush.bf16.msra.mxu0 %v1366
    %1382 = vmatpush.bf16.msra.mxu0 %v1365
    %1383 = vmatpush.bf16.msra.mxu0 %v1364
    %1384 = vmatpush.bf16.msra.mxu0 %v1363
    %1385 = vmatpush.bf16.msra.mxu0 %v1362
    %1386 = vmatmul.bf16.gmra.mxu0 %v1297
    %v1387 = vpop.f32.mrf.mxu0
    %v1388 = vadd.f32 %v1328, %v1387
    %v1389 = vpop.f32.mrf.mxu0
    %v1390 = vadd.f32 %v1328, %v1389
    %1391 = vmatmul.bf16.gmra.mxu0 %v1298
    %v1392 = vpop.f32.mrf.mxu0
    %v1393 = vadd.f32 %v1328, %v1392
    %v1394 = vpop.f32.mrf.mxu0
    %v1395 = vadd.f32 %v1328, %v1394
    %1396 = vmatmul.bf16.gmra.mxu0 %v1299
    %v1397 = vpop.f32.mrf.mxu0
    %v1398 = vadd.f32 %v1328, %v1397
    %v1399 = vpop.f32.mrf.mxu0
    %v1400 = vadd.f32 %v1328, %v1399
    %1401 = vmatmul.bf16.gmra.mxu0 %v1300
    %v1402 = vpop.f32.mrf.mxu0
    %v1403 = vadd.f32 %v1328, %v1402
    %v1404 = vpop.f32.mrf.mxu0
    %v1405 = vadd.f32 %v1328, %v1404
    %1406 = vmatmul.bf16.gmra.mxu0 %v1301
    %v1407 = vpop.f32.mrf.mxu0
    %v1408 = vadd.f32 %v1328, %v1407
    %v1409 = vpop.f32.mrf.mxu0
    %v1410 = vadd.f32 %v1328, %v1409
    %1411 = vmatmul.bf16.gmra.mxu0 %v1302
    %v1412 = vpop.f32.mrf.mxu0
    %v1413 = vadd.f32 %v1328, %v1412
    %v1414 = vpop.f32.mrf.mxu0
    %v1415 = vadd.f32 %v1328, %v1414
    %1416 = vmatmul.bf16.gmra.mxu0 %v1303
    %v1417 = vpop.f32.mrf.mxu0
    %v1418 = vadd.f32 %v1328, %v1417
    %v1419 = vpop.f32.mrf.mxu0
    %v1420 = vadd.f32 %v1328, %v1419
    %1421 = vmatmul.bf16.gmra.mxu0 %v1304
    %v1422 = vpop.f32.mrf.mxu0
    %v1423 = vadd.f32 %v1328, %v1422
    %v1424 = vpop.f32.mrf.mxu0
    %v1425 = vadd.f32 %v1328, %v1424
    %1426 = vmatmul.bf16.gmra.mxu0 %v1305
    %v1427 = vpop.f32.mrf.mxu0
    %v1428 = vadd.f32 %v1328, %v1427
    %v1429 = vpop.f32.mrf.mxu0
    %v1430 = vadd.f32 %v1328, %v1429
    %1431 = vmatmul.bf16.gmra.mxu0 %v1306
    %v1432 = vpop.f32.mrf.mxu0
    %v1433 = vadd.f32 %v1328, %v1432
    %v1434 = vpop.f32.mrf.mxu0
    %v1435 = vadd.f32 %v1328, %v1434
    %1436 = vmatmul.bf16.gmra.mxu0 %v1307
    %v1437 = vpop.f32.mrf.mxu0
    %v1438 = vadd.f32 %v1328, %v1437
    %v1439 = vpop.f32.mrf.mxu0
    %v1440 = vadd.f32 %v1328, %v1439
    %1441 = vmatmul.bf16.gmra.mxu0 %v1308
    %v1442 = vpop.f32.mrf.mxu0
    %v1443 = vadd.f32 %v1328, %v1442
    %v1444 = vpop.f32.mrf.mxu0
    %v1445 = vadd.f32 %v1328, %v1444
    %1446 = vmatmul.bf16.gmra.mxu0 %v1309
    %v1447 = vpop.f32.mrf.mxu0
    %v1448 = vadd.f32 %v1328, %v1447
    %v1449 = vpop.f32.mrf.mxu0
    %1450 = vdwg.mxu0
    %v1451 = vmax.f32 %v1388, 0.0
    %v1452 = vmax.f32 %v1390, 0.0
    %v1453 = vmax.f32 %v1393, 0.0
    %v1454 = vmax.f32 %v1395, 0.0
    %v1455 = vmax.f32 %v1398, 0.0
    %v1456 = vmax.f32 %v1400, 0.0
    %v1457 = vmax.f32 %v1403, 0.0
    %v1458 = vmax.f32 %v1405, 0.0
    %v1459 = vmax.f32 %v1408, 0.0
    %v1460 = vmax.f32 %v1410, 0.0
    %v1461 = vmax.f32 %v1413, 0.0
    %v1462 = vmax.f32 %v1415, 0.0
    %v1463 = vmax.f32 %v1418, 0.0
    %v1464 = vmax.f32 %v1420, 0.0
    %v1465 = vmax.f32 %v1423, 0.0
    %v1466 = vmax.f32 %v1425, 0.0
    %v1467 = vmax.f32 %v1428, 0.0
    %v1468 = vmax.f32 %v1430, 0.0
    %v1469 = vmax.f32 %v1433, 0.0
    %v1470 = vmax.f32 %v1435, 0.0
    %v1471 = vmax.f32 %v1438, 0.0
    %v1472 = vmax.f32 %v1440, 0.0
    %v1473 = vmax.f32 %v1443, 0.0
    %v1474 = vmax.f32 %v1445, 0.0
    %v1475 = vmax.f32 %v1448, 0.0
    %v1476 = vpack.c.bf16 %v1452, %v1451
    %v1477 = vpack.c.bf16 %v1454, %v1453
    %v1478 = vpack.c.bf16 %v1456, %v1455
    %v1479 = vpack.c.bf16 %v1458, %v1457
    %v1480 = vpack.c.bf16 %v1460, %v1459
    %v1481 = vpack.c.bf16 %v1462, %v1461
    %v1482 = vpack.c.bf16 %v1464, %v1463
    %v1483 = vpack.c.bf16 %v1466, %v1465
    %v1484 = vpack.c.bf16 %v1468, %v1467
    %v1485 = vpack.c.bf16 %v1470, %v1469
    %v1486 = vpack.c.bf16 %v1472, %v1471
    %v1487 = vpack.c.bf16 %v1474, %v1473
    %v1488 = vpack.c.bf16 %v1475, %v1475
    %v1489 = vld [vmem:[%s5] sm:$0xf]
    %v1490 = vld [vmem:[%s5 + $0x4] sm:$0xf]
    %v1491 = vld [vmem:[%s5 + $0x8] sm:$0xf]
    %v1492 = vld [vmem:[%s5 + $0xc] sm:$0xf]
    %v1493 = vld [vmem:[%s5 + $0x10] sm:$0xf]
    %v1494 = vld [vmem:[%s5 + $0x14] sm:$0xf]
    %v1495 = vld [vmem:[%s5 + $0x18] sm:$0xf]
    %v1496 = vld [vmem:[%s5 + $0x1c] sm:$0xf]
    %v1497 = vld [vmem:[%s6] sm:$0x1]
    %v1499 = vperm.slane %v1497, 0
    %v1509 = vunpack.c.l.b16 %v1489
    %v1510 = vunpack.c.l.b16 %v1490
    %v1511 = vunpack.c.l.b16 %v1491
    %v1512 = vunpack.c.l.b16 %v1492
    %v1513 = vunpack.c.l.b16 %v1493
    %v1514 = vunpack.c.l.b16 %v1494
    %v1515 = vunpack.c.l.b16 %v1495
    %v1516 = vunpack.c.l.b16 %v1496
    %v1517 = vpack.c.b16 %v1510, %v1509
    %v1518 = vpack.c.b16 %v1512, %v1511
    %v1519 = vpack.c.b16 %v1514, %v1513
    %v1520 = vpack.c.b16 %v1516, %v1515
    %vm1525 = vcmask 523264
    %v1527 = vsel %vm1525, %v1476, 0
    %v1530 = vsel %vm1525, %v1477, 0
    %v1533 = vsel %vm1525, %v1478, 0
    %v1536 = vsel %vm1525, %v1479, 0
    %v1539 = vsel %vm1525, %v1480, 0
    %v1542 = vsel %vm1525, %v1481, 0
    %v1545 = vsel %vm1525, %v1482, 0
    %v1548 = vsel %vm1525, %v1483, 0
    %v1551 = vsel %vm1525, %v1484, 0
    %v1554 = vsel %vm1525, %v1485, 0
    %v1557 = vsel %vm1525, %v1486, 0
    %v1560 = vsel %vm1525, %v1487, 0
    %v1563 = vsel %vm1525, %v1488, 0
    %1565 = vmatpush.bf16.msra.mxu0 0
    %1566 = vmatpush.bf16.msra.mxu0 0
    %1567 = vmatpush.bf16.msra.mxu0 0
    %1568 = vmatpush.bf16.msra.mxu0 0
    %1569 = vmatpush.bf16.msra.mxu0 %v1520
    %1570 = vmatpush.bf16.msra.mxu0 %v1519
    %1571 = vmatpush.bf16.msra.mxu0 %v1518
    %1572 = vmatpush.bf16.msra.mxu0 %v1517
    %1573 = vmatmul.bf16.gmra.mxu0 %v1527
    %v1574 = vpop.f32.mrf.mxu0
    %v1575 = vadd.f32 %v1499, %v1574
    %v1576 = vpop.f32.mrf.mxu0
    %v1577 = vadd.f32 %v1499, %v1576
    %1578 = vmatmul.bf16.gmra.mxu0 %v1530
    %v1579 = vpop.f32.mrf.mxu0
    %v1580 = vadd.f32 %v1499, %v1579
    %v1581 = vpop.f32.mrf.mxu0
    %v1582 = vadd.f32 %v1499, %v1581
    %1583 = vmatmul.bf16.gmra.mxu0 %v1533
    %v1584 = vpop.f32.mrf.mxu0
    %v1585 = vadd.f32 %v1499, %v1584
    %v1586 = vpop.f32.mrf.mxu0
    %v1587 = vadd.f32 %v1499, %v1586
    %1588 = vmatmul.bf16.gmra.mxu0 %v1536
    %v1589 = vpop.f32.mrf.mxu0
    %v1590 = vadd.f32 %v1499, %v1589
    %v1591 = vpop.f32.mrf.mxu0
    %v1592 = vadd.f32 %v1499, %v1591
    %1593 = vmatmul.bf16.gmra.mxu0 %v1539
    %v1594 = vpop.f32.mrf.mxu0
    %v1595 = vadd.f32 %v1499, %v1594
    %v1596 = vpop.f32.mrf.mxu0
    %v1597 = vadd.f32 %v1499, %v1596
    %1598 = vmatmul.bf16.gmra.mxu0 %v1542
    %v1599 = vpop.f32.mrf.mxu0
    %v1600 = vadd.f32 %v1499, %v1599
    %v1601 = vpop.f32.mrf.mxu0
    %v1602 = vadd.f32 %v1499, %v1601
    %1603 = vmatmul.bf16.gmra.mxu0 %v1545
    %v1604 = vpop.f32.mrf.mxu0
    %v1605 = vadd.f32 %v1499, %v1604
    %v1606 = vpop.f32.mrf.mxu0
    %v1607 = vadd.f32 %v1499, %v1606
    %1608 = vmatmul.bf16.gmra.mxu0 %v1548
    %v1609 = vpop.f32.mrf.mxu0
    %v1610 = vadd.f32 %v1499, %v1609
    %v1611 = vpop.f32.mrf.mxu0
    %v1612 = vadd.f32 %v1499, %v1611
    %1613 = vmatmul.bf16.gmra.mxu0 %v1551
    %v1614 = vpop.f32.mrf.mxu0
    %v1615 = vadd.f32 %v1499, %v1614
    %v1616 = vpop.f32.mrf.mxu0
    %v1617 = vadd.f32 %v1499, %v1616
    %1618 = vmatmul.bf16.gmra.mxu0 %v1554
    %v1619 = vpop.f32.mrf.mxu0
    %v1620 = vadd.f32 %v1499, %v1619
    %v1621 = vpop.f32.mrf.mxu0
    %v1622 = vadd.f32 %v1499, %v1621
    %1623 = vmatmul.bf16.gmra.mxu0 %v1557
    %v1624 = vpop.f32.mrf.mxu0
    %v1625 = vadd.f32 %v1499, %v1624
    %v1626 = vpop.f32.mrf.mxu0
    %v1627 = vadd.f32 %v1499, %v1626
    %1628 = vmatmul.bf16.gmra.mxu0 %v1560
    %v1629 = vpop.f32.mrf.mxu0
    %v1630 = vadd.f32 %v1499, %v1629
    %v1631 = vpop.f32.mrf.mxu0
    %v1632 = vadd.f32 %v1499, %v1631
    %1633 = vmatmul.bf16.gmra.mxu0 %v1563
    %v1634 = vpop.f32.mrf.mxu0
    %v1635 = vadd.f32 %v1499, %v1634
    %v1636 = vpop.f32.mrf.mxu0
    %1637 = vdwg.mxu0
    %v1638 = vpack.c.bf16 %v1575, %v1575
    %v1639 = vpack.c.bf16 %v1577, %v1577
    %v1640 = vpack.c.bf16 %v1580, %v1580
    %v1641 = vpack.c.bf16 %v1582, %v1582
    %v1642 = vpack.c.bf16 %v1585, %v1585
    %v1643 = vpack.c.bf16 %v1587, %v1587
    %v1644 = vpack.c.bf16 %v1590, %v1590
    %v1645 = vpack.c.bf16 %v1592, %v1592
    %v1646 = vpack.c.bf16 %v1595, %v1595
    %v1647 = vpack.c.bf16 %v1597, %v1597
    %v1648 = vpack.c.bf16 %v1600, %v1600
    %v1649 = vpack.c.bf16 %v1602, %v1602
    %v1650 = vpack.c.bf16 %v1605, %v1605
    %v1651 = vpack.c.bf16 %v1607, %v1607
    %v1652 = vpack.c.bf16 %v1610, %v1610
    %v1653 = vpack.c.bf16 %v1612, %v1612
    %v1654 = vpack.c.bf16 %v1615, %v1615
    %v1655 = vpack.c.bf16 %v1617, %v1617
    %v1656 = vpack.c.bf16 %v1620, %v1620
    %v1657 = vpack.c.bf16 %v1622, %v1622
    %v1658 = vpack.c.bf16 %v1625, %v1625
    %v1659 = vpack.c.bf16 %v1627, %v1627
    %v1660 = vpack.c.bf16 %v1630, %v1630
    %v1661 = vpack.c.bf16 %v1632, %v1632
    %v1662 = vpack.c.bf16 %v1635, %v1635
    %1663 = vst [vmem:[%s7] sm:$0xf] %v1638
    %1664 = vst [vmem:[%s7 + $0x4] sm:$0xf] %v1639
    %1665 = vst [vmem:[%s7 + $0x8] sm:$0xf] %v1640
    %1666 = vst [vmem:[%s7 + $0xc] sm:$0xf] %v1641
    %1667 = vst [vmem:[%s7 + $0x10] sm:$0xf] %v1642
    %1668 = vst [vmem:[%s7 + $0x14] sm:$0xf] %v1643
    %1669 = vst [vmem:[%s7 + $0x18] sm:$0xf] %v1644
    %1670 = vst [vmem:[%s7 + $0x1c] sm:$0xf] %v1645
    %1671 = vst [vmem:[%s7 + $0x20] sm:$0xf] %v1646
    %1672 = vst [vmem:[%s7 + $0x24] sm:$0xf] %v1647
    %1673 = vst [vmem:[%s7 + $0x28] sm:$0xf] %v1648
    %1674 = vst [vmem:[%s7 + $0x2c] sm:$0xf] %v1649
    %1675 = vst [vmem:[%s7 + $0x30] sm:$0xf] %v1650
    %1676 = vst [vmem:[%s7 + $0x34] sm:$0xf] %v1651
    %1677 = vst [vmem:[%s7 + $0x38] sm:$0xf] %v1652
    %1678 = vst [vmem:[%s7 + $0x3c] sm:$0xf] %v1653
    %1679 = vst [vmem:[%s7 + $0x40] sm:$0xf] %v1654
    %1680 = vst [vmem:[%s7 + $0x44] sm:$0xf] %v1655
    %1681 = vst [vmem:[%s7 + $0x48] sm:$0xf] %v1656
    %1682 = vst [vmem:[%s7 + $0x4c] sm:$0xf] %v1657
    %1683 = vst [vmem:[%s7 + $0x50] sm:$0xf] %v1658
    %1684 = vst [vmem:[%s7 + $0x54] sm:$0xf] %v1659
    %1685 = vst [vmem:[%s7 + $0x58] sm:$0xf] %v1660
    %1686 = vst [vmem:[%s7 + $0x5c] sm:$0xf] %v1661
    %1687 = vst [vmem:[%s7 + $0x60] sm:$0xf] %v1662
    // Predicated region
    $region38: #{feed_forward_nn.1} parent=1 // pred_check
      _
    $region39: #{feed_forward_nn.1} parent=1 // pred_check_branch
      %1689 = sbr.rel (0) target = $region41
    $region40: #{feed_forward_nn.1} parent=1 // pred_region
      _
    $region41: #{feed_forward_nn.1} parent=1 // pred_fallthru
      _
    // Predicated region
    $region42: #{feed_forward_nn.1} parent=1 // pred_check
      _
    $region43: #{feed_forward_nn.1} parent=1 // pred_check_branch
      %1691 = sbr.rel (0) target = $region45
    $region44: #{feed_forward_nn.1} parent=1 // pred_region
      _
    $region45: #{feed_forward_nn.1} parent=1 // pred_fallthru
      _
    %1692 = vsyncpa [#allocation3], 1
    %1693 = vsyncpa [#allocation5], 1

</llo_original>
